<compile_context>
chip_gen: v6e
topology: v6e:2x2x1
jax: 0.10.0
libtpu: 0.0.40
codegen_flags: <defaults>
</compile_context>

<pallas_src>
import functools

import jax
import jax.numpy as jnp
import numpy as np
from jax.experimental import pallas as pl
from jax.experimental.pallas import tpu as pltpu


def _attn_mixer_kernel(x_ref, wqkv_ref, wproj_ref, bproj_ref, *rest,
                       num_heads, head_dim, b_blk, seq_len, mixer,
                       matmul_dtype):
    """One grid step processes b_blk batch elements.

    x_ref    : (b_blk, L, C)   input tokens
    wqkv_ref : (C, 3C)         fused qkv weight (scale pre-folded into q cols)
    wproj_ref: (C, C)          output-projection weight
    bproj_ref: (1, C)          output-projection bias (f32)
    mask_ref : (L, L)          additive 0/-inf window mask (Local mixer only)
    o_ref    : (b_blk, L, C)   output tokens
    """
    if mixer == "Local":
        mask_ref, o_ref = rest
    else:
        (o_ref,) = rest

    H, D, L = num_heads, head_dim, seq_len
    C = H * D
    BL = b_blk * L

    x = x_ref[...].reshape(BL, C)
    if matmul_dtype is not None:
        x = x.astype(matmul_dtype)

    # (1) Fused lane-dense QKV projection: one (BL, C) @ (C, 3C) MXU call.
    qkv = jnp.dot(x, wqkv_ref[...], preferred_element_type=jnp.float32)
    if matmul_dtype is not None:
        qkv = qkv.astype(matmul_dtype)           # cast once before slicing

    # (2) Head split: lane slices stacked into a single (H*b_blk, L, D) batch.
    #     Pure data movement (no matmuls in this loop); each slice is consumed
    #     immediately by the stack, so live ranges stay small.
    def split_heads(base):
        parts = [qkv[:, base + h * D: base + (h + 1) * D].reshape(b_blk, L, D)
                 for h in range(H)]
        return jnp.stack(parts, axis=0).reshape(H * b_blk, L, D)

    q = split_heads(0)
    k = split_heads(C)
    v = split_heads(2 * C)

    # (3) Scores for all (head, batch) pairs in one batched dot
    #     (flash-attention 'nqd,nkd->nqk' pattern; f32 accumulation).
    s = jnp.einsum('nqd,nkd->nqk', q, k,
                   preferred_element_type=jnp.float32)        # (H*b, L, L)

    if mixer == "Local":
        # Grid-invariant additive 0/-inf window mask, DMA'd once (constant
        # index_map).  Matches `attn += self.mask` in the PyTorch module.
        s = s + mask_ref[...]

    # (4) Numerically-stable softmax in f32; reciprocal on the EUP.
    s = s - jnp.max(s, axis=-1, keepdims=True)
    p = jnp.exp(s)
    p = p * pl.reciprocal(jnp.sum(p, axis=-1, keepdims=True), approx=True)
    if matmul_dtype is not None:
        p = p.astype(matmul_dtype)

    # (5) Context for all (head, batch) pairs in one batched dot.
    ctx = jnp.einsum('nqk,nkd->nqd', p, v,
                     preferred_element_type=jnp.float32)       # (H*b, L, D)

    # Re-group heads onto lanes -> (b_blk, L, C) with channel order h*D + d,
    # matching the PyTorch permute(0,2,1,3).reshape(-1, L, C).
    ctx = ctx.reshape(H, b_blk, L, D)
    ctx = jnp.concatenate([ctx[h] for h in range(H)], axis=-1)  # (b, L, C)
    ctx = ctx.reshape(BL, C)
    if matmul_dtype is not None:
        ctx = ctx.astype(matmul_dtype)

    # (6) Fused lane-dense output projection + bias (f32 accumulation).
    out = jnp.dot(ctx, wproj_ref[...], preferred_element_type=jnp.float32)
    out = out + bproj_ref[...].astype(jnp.float32)
    o_ref[...] = out.reshape(b_blk, L, C).astype(o_ref.dtype)


def build_local_mask(height, width, local_k=(7, 11)):
    """Reproduce the PyTorch 'Local' mixer additive 0/-inf mask, shape (L, L)."""
    hk, wk = local_k
    L = height * width
    mask = np.ones((L, height + hk - 1, width + wk - 1), dtype=np.float32)
    for h in range(height):
        for w in range(width):
            mask[h * width + w, h:h + hk, w:w + wk] = 0.0
    mask = mask[:, hk // 2:height + hk // 2, wk // 2:width + wk // 2]
    mask = mask.reshape(L, L)
    mask[mask >= 1] = -np.inf
    return jnp.asarray(mask)


def _pick_batch_block(n):
    """Pick batch elements per grid step.

    Amortize the ~0.35us per-step pipeline overhead with multiple batch
    elements per step, but keep >= 4 grid steps when possible so a 2-TC chip
    (v7x) gets >= 2 pipelined steps per TensorCore; fall back to >= 2, then 1.
    """
    for min_steps in (4, 2, 1):
        for cand in (8, 4, 2, 1):
            if n % cand == 0 and n // cand >= min_steps:
                return cand
    return 1


def attn_mixer_forward(x_nhwc, w_qkv, w_proj, b_proj, *, num_heads,
                       mixer="Global", local_k=(7, 11), batch_block=None,
                       matmul_dtype=jnp.bfloat16):
    """x_nhwc: (N, H, W, C).  Returns (N, L, C) like the PyTorch module."""
    N, H_img, W_img, C = x_nhwc.shape
    L = H_img * W_img
    assert C % num_heads == 0
    D = C // num_heads
    scale = D ** (-0.5)

    x = x_nhwc.reshape(N, L, C)

    # One-time weight prep (outside the kernel): fold the attention scale into
    # the q columns of the fused qkv weight (in f32, before any bf16 cast).
    w_qkv_scaled = jnp.concatenate([w_qkv[:, :C] * scale, w_qkv[:, C:]], axis=1)
    if matmul_dtype is not None:
        wqkv_p = w_qkv_scaled.astype(matmul_dtype)
        wproj_p = w_proj.astype(matmul_dtype)
    else:
        wqkv_p = w_qkv_scaled
        wproj_p = w_proj
    bproj_2d = b_proj.reshape(1, C).astype(jnp.float32)

    b_blk = batch_block if batch_block is not None else _pick_batch_block(N)
    assert N % b_blk == 0, "batch must be divisible by the batch block"
    grid = (N // b_blk,)

    in_specs = [
        pl.BlockSpec((b_blk, L, C), lambda n: (n, 0, 0)),   # x
        pl.BlockSpec((C, 3 * C), lambda n: (0, 0)),         # fused qkv weight
        pl.BlockSpec((C, C), lambda n: (0, 0)),             # proj weight
        pl.BlockSpec((1, C), lambda n: (0, 0)),             # proj bias
    ]
    args = [x, wqkv_p, wproj_p, bproj_2d]
    if mixer == "Local":
        mask = build_local_mask(H_img, W_img, local_k)      # (L, L) f32, 0/-inf
        in_specs.append(pl.BlockSpec((L, L), lambda n: (0, 0)))
        args.append(mask)

    # Rough per-step VMEM budget (double-buffered x/out blocks + resident
    # weights/mask + live intermediates), with 2x headroom, clamped to fit
    # v7x's 64 MiB physical VMEM.
    w_item = 2 if matmul_dtype is not None else 4
    block_bytes = b_blk * L * C * x.dtype.itemsize
    weight_bytes = (3 * C * C + C * C) * w_item + C * 4
    mask_bytes = (L * L * 4) if mixer == "Local" else 0
    interm_bytes = (b_blk * L * 3 * C * 4 * 2          # qkv + head stacks
                    + num_heads * b_blk * L * L * 4 * 2  # scores + probs
                    + b_blk * L * C * 4 * 2)             # ctx + out
    est = 2 * (2 * block_bytes) + 2 * (weight_bytes + mask_bytes) + interm_bytes
    vmem_limit = int(min(max(2 * est, 32 * 1024 * 1024), 64 * 1024 * 1024))

    kernel = functools.partial(
        _attn_mixer_kernel, num_heads=num_heads, head_dim=D, b_blk=b_blk,
        seq_len=L, mixer=mixer, matmul_dtype=matmul_dtype)

    out = pl.pallas_call(
        kernel,
        out_shape=jax.ShapeDtypeStruct((N, L, C), x.dtype),
        grid_spec=pltpu.PrefetchScalarGridSpec(
            num_scalar_prefetch=0,
            grid=grid,
            in_specs=in_specs,
            out_specs=pl.BlockSpec((b_blk, L, C), lambda n: (n, 0, 0)),
        ),
        compiler_params=pltpu.CompilerParams(
            dimension_semantics=("parallel",),
            vmem_limit_bytes=vmem_limit),
    )(*args)
    return out


def _reference_forward(x_nhwc, w_qkv, w_proj, b_proj, *, num_heads,
                       mixer="Global", local_k=(7, 11)):
    """Plain-JAX (f32) reference mirroring the PyTorch forward."""
    N, H, W, C = x_nhwc.shape
    L = H * W
    hd = C // num_heads
    scale = hd ** (-0.5)
    x = x_nhwc.reshape(N, L, C)
    qkv = x @ w_qkv                                          # (N, L, 3C)
    qkv = qkv.reshape(N, L, 3, num_heads, hd).transpose(2, 0, 3, 1, 4)
    q, k, v = qkv[0] * scale, qkv[1], qkv[2]                 # (N, Hh, L, hd)
    attn = q @ k.transpose(0, 1, 3, 2)                       # (N, Hh, L, L)
    if mixer == "Local":
        attn = attn + build_local_mask(H, W, local_k)[None, None]
    attn = jax.nn.softmax(attn, axis=-1)
    out = (attn @ v).transpose(0, 2, 1, 3).reshape(N, L, C)
    return out @ w_proj + b_proj


if __name__ == "__main__":
    # embed_dims=32, num_heads=8 (head_dim=4), input_shape=[4, 8] -> L=32, N=2.
    N, H_img, W_img, C = 2, 4, 8, 32
    num_heads = 8

    key = jax.random.PRNGKey(0)
    kx, kq, kp, kb = jax.random.split(key, 4)
    x = jax.random.normal(kx, (N, H_img, W_img, C), dtype=jnp.float32)
    w_qkv = jax.random.normal(kq, (C, 3 * C), dtype=jnp.float32) * 0.1
    w_proj = jax.random.normal(kp, (C, C), dtype=jnp.float32) * 0.1
    b_proj = jax.random.normal(kb, (C,), dtype=jnp.float32) * 0.1

    # Global mixer, default bf16 MXU inputs (f32 softmax / accumulation).
    ref_g = _reference_forward(x, w_qkv, w_proj, b_proj,
                               num_heads=num_heads, mixer="Global")
    out_g = jax.block_until_ready(
        attn_mixer_forward(x, w_qkv, w_proj, b_proj,
                           num_heads=num_heads, mixer="Global"))
    np.testing.assert_allclose(np.asarray(out_g), np.asarray(ref_g),
                               rtol=3e-2, atol=3e-2)

    # Local mixer (precomputed 0/-inf window mask), default bf16.
    ref_l = _reference_forward(x, w_qkv, w_proj, b_proj,
                               num_heads=num_heads, mixer="Local",
                               local_k=(3, 5))
    out_l = jax.block_until_ready(
        attn_mixer_forward(x, w_qkv, w_proj, b_proj,
                           num_heads=num_heads, mixer="Local",
                           local_k=(3, 5)))
    np.testing.assert_allclose(np.asarray(out_l), np.asarray(ref_l),
                               rtol=3e-2, atol=3e-2)

    # Full-f32 matmul path (matmul_dtype=None); only approx-reciprocal error.
    out_f32 = jax.block_until_ready(
        attn_mixer_forward(x, w_qkv, w_proj, b_proj,
                           num_heads=num_heads, mixer="Global",
                           matmul_dtype=None))
    np.testing.assert_allclose(np.asarray(out_f32), np.asarray(ref_g),
                               rtol=5e-3, atol=5e-3)

    print("KERNEL_OK")
</pallas_src>

<mosaic_0001>
module attributes {stable_mosaic.version = 11 : i64} {
  func.func @_attn_mixer_kernel(%arg0: i32, %arg1: memref<1x32x32xf32, #tpu.memory_space<vmem>>, %arg2: memref<32x96xbf16, #tpu.memory_space<vmem>>, %arg3: memref<32x32xbf16, #tpu.memory_space<vmem>>, %arg4: memref<1x32xf32, #tpu.memory_space<vmem>>, %arg5: memref<1x32x32xf32, #tpu.memory_space<vmem>>) attributes {dimension_semantics = [#tpu.dimension_semantics<parallel>], iteration_bounds = array<i64: 2>, scalar_prefetch = 0 : i64, scratch_operands = 0 : i64, tpu.core_type = #tpu.core_type<tc>, window_params = [{transform_indices = @transform_0, window_bounds = array<i64: 1, 32, 32>}, {pipeline_mode = #tpu.pipeline_mode<synchronous>, transform_indices = @transform_1, window_bounds = array<i64: 32, 96>}, {pipeline_mode = #tpu.pipeline_mode<synchronous>, transform_indices = @transform_2, window_bounds = array<i64: 32, 32>}, {pipeline_mode = #tpu.pipeline_mode<synchronous>, transform_indices = @transform_3, window_bounds = array<i64: 1, 32>}, {transform_indices = @transform_4, window_bounds = array<i64: 1, 32, 32>}]} {
    %c0 = arith.constant 0 : index
    %c0_0 = arith.constant 0 : index
    %c0_1 = arith.constant 0 : index
    %0 = vector.load %arg1[%c0, %c0_0, %c0_1] : memref<1x32x32xf32, #tpu.memory_space<vmem>>, vector<1x32x32xf32>
    %1 = vector.shape_cast %0 : vector<1x32x32xf32> to vector<32x32xf32>
    %2 = arith.truncf %1 : vector<32x32xf32> to vector<32x32xbf16>
    %c0_2 = arith.constant 0 : index
    %c0_3 = arith.constant 0 : index
    %3 = vector.load %arg2[%c0_2, %c0_3] : memref<32x96xbf16, #tpu.memory_space<vmem>>, vector<32x96xbf16>
    %cst = arith.constant dense<0.000000e+00> : vector<32x96xf32>
    %4 = tpu.matmul %2, %3, %cst {dimension_numbers = #tpu.dot_dimension_numbers<[1], [0], [0], [1], [0, 0, 1, 1], [], []>} : vector<32x32xbf16>, vector<32x96xbf16>, vector<32x96xf32> -> vector<32x96xf32>
    %5 = arith.truncf %4 : vector<32x96xf32> to vector<32x96xbf16>
    %6 = vector.extract_strided_slice %5 {offsets = [0, 0], sizes = [32, 4], strides = [1, 1]} : vector<32x96xbf16> to vector<32x4xbf16>
    %7 = vector.shape_cast %6 : vector<32x4xbf16> to vector<1x32x4xbf16>
    %8 = vector.extract_strided_slice %5 {offsets = [0, 4], sizes = [32, 4], strides = [1, 1]} : vector<32x96xbf16> to vector<32x4xbf16>
    %9 = vector.shape_cast %8 : vector<32x4xbf16> to vector<1x32x4xbf16>
    %10 = vector.extract_strided_slice %5 {offsets = [0, 8], sizes = [32, 4], strides = [1, 1]} : vector<32x96xbf16> to vector<32x4xbf16>
    %11 = vector.shape_cast %10 : vector<32x4xbf16> to vector<1x32x4xbf16>
    %12 = vector.extract_strided_slice %5 {offsets = [0, 12], sizes = [32, 4], strides = [1, 1]} : vector<32x96xbf16> to vector<32x4xbf16>
    %13 = vector.shape_cast %12 : vector<32x4xbf16> to vector<1x32x4xbf16>
    %14 = vector.extract_strided_slice %5 {offsets = [0, 16], sizes = [32, 4], strides = [1, 1]} : vector<32x96xbf16> to vector<32x4xbf16>
    %15 = vector.shape_cast %14 : vector<32x4xbf16> to vector<1x32x4xbf16>
    %16 = vector.extract_strided_slice %5 {offsets = [0, 20], sizes = [32, 4], strides = [1, 1]} : vector<32x96xbf16> to vector<32x4xbf16>
    %17 = vector.shape_cast %16 : vector<32x4xbf16> to vector<1x32x4xbf16>
    %18 = vector.extract_strided_slice %5 {offsets = [0, 24], sizes = [32, 4], strides = [1, 1]} : vector<32x96xbf16> to vector<32x4xbf16>
    %19 = vector.shape_cast %18 : vector<32x4xbf16> to vector<1x32x4xbf16>
    %20 = vector.extract_strided_slice %5 {offsets = [0, 28], sizes = [32, 4], strides = [1, 1]} : vector<32x96xbf16> to vector<32x4xbf16>
    %21 = vector.shape_cast %20 : vector<32x4xbf16> to vector<1x32x4xbf16>
    %22 = vector.shape_cast %7 : vector<1x32x4xbf16> to vector<1x1x32x4xbf16>
    %23 = vector.shape_cast %9 : vector<1x32x4xbf16> to vector<1x1x32x4xbf16>
    %24 = vector.shape_cast %11 : vector<1x32x4xbf16> to vector<1x1x32x4xbf16>
    %25 = vector.shape_cast %13 : vector<1x32x4xbf16> to vector<1x1x32x4xbf16>
    %26 = vector.shape_cast %15 : vector<1x32x4xbf16> to vector<1x1x32x4xbf16>
    %27 = vector.shape_cast %17 : vector<1x32x4xbf16> to vector<1x1x32x4xbf16>
    %28 = vector.shape_cast %19 : vector<1x32x4xbf16> to vector<1x1x32x4xbf16>
    %29 = vector.shape_cast %21 : vector<1x32x4xbf16> to vector<1x1x32x4xbf16>
    %30 = tpu.concatenate %22, %23, %24, %25, %26, %27, %28, %29 in 0 : vector<1x1x32x4xbf16>, vector<1x1x32x4xbf16>, vector<1x1x32x4xbf16>, vector<1x1x32x4xbf16>, vector<1x1x32x4xbf16>, vector<1x1x32x4xbf16>, vector<1x1x32x4xbf16>, vector<1x1x32x4xbf16> -> vector<8x1x32x4xbf16>
    %31 = vector.shape_cast %30 : vector<8x1x32x4xbf16> to vector<8x32x4xbf16>
    %32 = vector.extract_strided_slice %5 {offsets = [0, 32], sizes = [32, 4], strides = [1, 1]} : vector<32x96xbf16> to vector<32x4xbf16>
    %33 = vector.shape_cast %32 : vector<32x4xbf16> to vector<1x32x4xbf16>
    %34 = vector.extract_strided_slice %5 {offsets = [0, 36], sizes = [32, 4], strides = [1, 1]} : vector<32x96xbf16> to vector<32x4xbf16>
    %35 = vector.shape_cast %34 : vector<32x4xbf16> to vector<1x32x4xbf16>
    %36 = vector.extract_strided_slice %5 {offsets = [0, 40], sizes = [32, 4], strides = [1, 1]} : vector<32x96xbf16> to vector<32x4xbf16>
    %37 = vector.shape_cast %36 : vector<32x4xbf16> to vector<1x32x4xbf16>
    %38 = vector.extract_strided_slice %5 {offsets = [0, 44], sizes = [32, 4], strides = [1, 1]} : vector<32x96xbf16> to vector<32x4xbf16>
    %39 = vector.shape_cast %38 : vector<32x4xbf16> to vector<1x32x4xbf16>
    %40 = vector.extract_strided_slice %5 {offsets = [0, 48], sizes = [32, 4], strides = [1, 1]} : vector<32x96xbf16> to vector<32x4xbf16>
    %41 = vector.shape_cast %40 : vector<32x4xbf16> to vector<1x32x4xbf16>
    %42 = vector.extract_strided_slice %5 {offsets = [0, 52], sizes = [32, 4], strides = [1, 1]} : vector<32x96xbf16> to vector<32x4xbf16>
    %43 = vector.shape_cast %42 : vector<32x4xbf16> to vector<1x32x4xbf16>
    %44 = vector.extract_strided_slice %5 {offsets = [0, 56], sizes = [32, 4], strides = [1, 1]} : vector<32x96xbf16> to vector<32x4xbf16>
    %45 = vector.shape_cast %44 : vector<32x4xbf16> to vector<1x32x4xbf16>
    %46 = vector.extract_strided_slice %5 {offsets = [0, 60], sizes = [32, 4], strides = [1, 1]} : vector<32x96xbf16> to vector<32x4xbf16>
    %47 = vector.shape_cast %46 : vector<32x4xbf16> to vector<1x32x4xbf16>
    %48 = vector.shape_cast %33 : vector<1x32x4xbf16> to vector<1x1x32x4xbf16>
    %49 = vector.shape_cast %35 : vector<1x32x4xbf16> to vector<1x1x32x4xbf16>
    %50 = vector.shape_cast %37 : vector<1x32x4xbf16> to vector<1x1x32x4xbf16>
    %51 = vector.shape_cast %39 : vector<1x32x4xbf16> to vector<1x1x32x4xbf16>
    %52 = vector.shape_cast %41 : vector<1x32x4xbf16> to vector<1x1x32x4xbf16>
    %53 = vector.shape_cast %43 : vector<1x32x4xbf16> to vector<1x1x32x4xbf16>
    %54 = vector.shape_cast %45 : vector<1x32x4xbf16> to vector<1x1x32x4xbf16>
    %55 = vector.shape_cast %47 : vector<1x32x4xbf16> to vector<1x1x32x4xbf16>
    %56 = tpu.concatenate %48, %49, %50, %51, %52, %53, %54, %55 in 0 : vector<1x1x32x4xbf16>, vector<1x1x32x4xbf16>, vector<1x1x32x4xbf16>, vector<1x1x32x4xbf16>, vector<1x1x32x4xbf16>, vector<1x1x32x4xbf16>, vector<1x1x32x4xbf16>, vector<1x1x32x4xbf16> -> vector<8x1x32x4xbf16>
    %57 = vector.shape_cast %56 : vector<8x1x32x4xbf16> to vector<8x32x4xbf16>
    %58 = vector.extract_strided_slice %5 {offsets = [0, 64], sizes = [32, 4], strides = [1, 1]} : vector<32x96xbf16> to vector<32x4xbf16>
    %59 = vector.shape_cast %58 : vector<32x4xbf16> to vector<1x32x4xbf16>
    %60 = vector.extract_strided_slice %5 {offsets = [0, 68], sizes = [32, 4], strides = [1, 1]} : vector<32x96xbf16> to vector<32x4xbf16>
    %61 = vector.shape_cast %60 : vector<32x4xbf16> to vector<1x32x4xbf16>
    %62 = vector.extract_strided_slice %5 {offsets = [0, 72], sizes = [32, 4], strides = [1, 1]} : vector<32x96xbf16> to vector<32x4xbf16>
    %63 = vector.shape_cast %62 : vector<32x4xbf16> to vector<1x32x4xbf16>
    %64 = vector.extract_strided_slice %5 {offsets = [0, 76], sizes = [32, 4], strides = [1, 1]} : vector<32x96xbf16> to vector<32x4xbf16>
    %65 = vector.shape_cast %64 : vector<32x4xbf16> to vector<1x32x4xbf16>
    %66 = vector.extract_strided_slice %5 {offsets = [0, 80], sizes = [32, 4], strides = [1, 1]} : vector<32x96xbf16> to vector<32x4xbf16>
    %67 = vector.shape_cast %66 : vector<32x4xbf16> to vector<1x32x4xbf16>
    %68 = vector.extract_strided_slice %5 {offsets = [0, 84], sizes = [32, 4], strides = [1, 1]} : vector<32x96xbf16> to vector<32x4xbf16>
    %69 = vector.shape_cast %68 : vector<32x4xbf16> to vector<1x32x4xbf16>
    %70 = vector.extract_strided_slice %5 {offsets = [0, 88], sizes = [32, 4], strides = [1, 1]} : vector<32x96xbf16> to vector<32x4xbf16>
    %71 = vector.shape_cast %70 : vector<32x4xbf16> to vector<1x32x4xbf16>
    %72 = vector.extract_strided_slice %5 {offsets = [0, 92], sizes = [32, 4], strides = [1, 1]} : vector<32x96xbf16> to vector<32x4xbf16>
    %73 = vector.shape_cast %72 : vector<32x4xbf16> to vector<1x32x4xbf16>
    %74 = vector.shape_cast %59 : vector<1x32x4xbf16> to vector<1x1x32x4xbf16>
    %75 = vector.shape_cast %61 : vector<1x32x4xbf16> to vector<1x1x32x4xbf16>
    %76 = vector.shape_cast %63 : vector<1x32x4xbf16> to vector<1x1x32x4xbf16>
    %77 = vector.shape_cast %65 : vector<1x32x4xbf16> to vector<1x1x32x4xbf16>
    %78 = vector.shape_cast %67 : vector<1x32x4xbf16> to vector<1x1x32x4xbf16>
    %79 = vector.shape_cast %69 : vector<1x32x4xbf16> to vector<1x1x32x4xbf16>
    %80 = vector.shape_cast %71 : vector<1x32x4xbf16> to vector<1x1x32x4xbf16>
    %81 = vector.shape_cast %73 : vector<1x32x4xbf16> to vector<1x1x32x4xbf16>
    %82 = tpu.concatenate %74, %75, %76, %77, %78, %79, %80, %81 in 0 : vector<1x1x32x4xbf16>, vector<1x1x32x4xbf16>, vector<1x1x32x4xbf16>, vector<1x1x32x4xbf16>, vector<1x1x32x4xbf16>, vector<1x1x32x4xbf16>, vector<1x1x32x4xbf16>, vector<1x1x32x4xbf16> -> vector<8x1x32x4xbf16>
    %83 = vector.shape_cast %82 : vector<8x1x32x4xbf16> to vector<8x32x4xbf16>
    "tpu.trace_start"() <{level = 10 : i32, message = "nqd,nkd->nqk"}> : () -> ()
    %cst_4 = arith.constant dense<0.000000e+00> : vector<8x32x32xf32>
    %84 = tpu.matmul %31, %57, %cst_4 {dimension_numbers = #tpu.dot_dimension_numbers<[2], [2], [1], [1], [0, 0, 0, 1, 1, 1], [0], [0]>} : vector<8x32x4xbf16>, vector<8x32x4xbf16>, vector<8x32x32xf32> -> vector<8x32x32xf32>
    "tpu.trace_stop"() : () -> ()
    %cst_5 = arith.constant dense<0xFF800000> : vector<8x32xf32>
    %85 = vector.multi_reduction <maximumf>, %84, %cst_5 [2] : vector<8x32x32xf32> to vector<8x32xf32>
    %86 = vector.shape_cast %85 : vector<8x32xf32> to vector<8x32x1xf32>
    %87 = vector.broadcast %86 : vector<8x32x1xf32> to vector<8x32x32xf32>
    %88 = arith.subf %84, %87 : vector<8x32x32xf32>
    %89 = math.exp %88 : vector<8x32x32xf32>
    %cst_6 = arith.constant dense<0.000000e+00> : vector<8x32xf32>
    %90 = vector.multi_reduction <add>, %89, %cst_6 [2] : vector<8x32x32xf32> to vector<8x32xf32>
    %91 = vector.shape_cast %90 : vector<8x32xf32> to vector<8x32x1xf32>
    %92 = tpu.reciprocal %91 {approx = true} : vector<8x32x1xf32> -> vector<8x32x1xf32>
    %93 = vector.broadcast %92 : vector<8x32x1xf32> to vector<8x32x32xf32>
    %94 = arith.mulf %89, %93 : vector<8x32x32xf32>
    %95 = arith.truncf %94 : vector<8x32x32xf32> to vector<8x32x32xbf16>
    "tpu.trace_start"() <{level = 10 : i32, message = "nqk,nkd->nqd"}> : () -> ()
    %cst_7 = arith.constant dense<0.000000e+00> : vector<8x32x4xf32>
    %96 = tpu.matmul %95, %83, %cst_7 {dimension_numbers = #tpu.dot_dimension_numbers<[2], [1], [1], [2], [0, 0, 0, 1, 1, 2], [0], [0]>} : vector<8x32x32xbf16>, vector<8x32x4xbf16>, vector<8x32x4xf32> -> vector<8x32x4xf32>
    "tpu.trace_stop"() : () -> ()
    %97 = vector.shape_cast %96 : vector<8x32x4xf32> to vector<8x1x32x4xf32>
    %98 = vector.extract_strided_slice %97 {offsets = [0, 0, 0, 0], sizes = [1, 1, 32, 4], strides = [1, 1, 1, 1]} : vector<8x1x32x4xf32> to vector<1x1x32x4xf32>
    %99 = vector.shape_cast %98 : vector<1x1x32x4xf32> to vector<1x32x4xf32>
    %100 = vector.extract_strided_slice %97 {offsets = [1, 0, 0, 0], sizes = [1, 1, 32, 4], strides = [1, 1, 1, 1]} : vector<8x1x32x4xf32> to vector<1x1x32x4xf32>
    %101 = vector.shape_cast %100 : vector<1x1x32x4xf32> to vector<1x32x4xf32>
    %102 = vector.extract_strided_slice %97 {offsets = [2, 0, 0, 0], sizes = [1, 1, 32, 4], strides = [1, 1, 1, 1]} : vector<8x1x32x4xf32> to vector<1x1x32x4xf32>
    %103 = vector.shape_cast %102 : vector<1x1x32x4xf32> to vector<1x32x4xf32>
    %104 = vector.extract_strided_slice %97 {offsets = [3, 0, 0, 0], sizes = [1, 1, 32, 4], strides = [1, 1, 1, 1]} : vector<8x1x32x4xf32> to vector<1x1x32x4xf32>
    %105 = vector.shape_cast %104 : vector<1x1x32x4xf32> to vector<1x32x4xf32>
    %106 = vector.extract_strided_slice %97 {offsets = [4, 0, 0, 0], sizes = [1, 1, 32, 4], strides = [1, 1, 1, 1]} : vector<8x1x32x4xf32> to vector<1x1x32x4xf32>
    %107 = vector.shape_cast %106 : vector<1x1x32x4xf32> to vector<1x32x4xf32>
    %108 = vector.extract_strided_slice %97 {offsets = [5, 0, 0, 0], sizes = [1, 1, 32, 4], strides = [1, 1, 1, 1]} : vector<8x1x32x4xf32> to vector<1x1x32x4xf32>
    %109 = vector.shape_cast %108 : vector<1x1x32x4xf32> to vector<1x32x4xf32>
    %110 = vector.extract_strided_slice %97 {offsets = [6, 0, 0, 0], sizes = [1, 1, 32, 4], strides = [1, 1, 1, 1]} : vector<8x1x32x4xf32> to vector<1x1x32x4xf32>
    %111 = vector.shape_cast %110 : vector<1x1x32x4xf32> to vector<1x32x4xf32>
    %112 = vector.extract_strided_slice %97 {offsets = [7, 0, 0, 0], sizes = [1, 1, 32, 4], strides = [1, 1, 1, 1]} : vector<8x1x32x4xf32> to vector<1x1x32x4xf32>
    %113 = vector.shape_cast %112 : vector<1x1x32x4xf32> to vector<1x32x4xf32>
    %114 = tpu.concatenate %99, %101, %103, %105, %107, %109, %111, %113 in 2 : vector<1x32x4xf32>, vector<1x32x4xf32>, vector<1x32x4xf32>, vector<1x32x4xf32>, vector<1x32x4xf32>, vector<1x32x4xf32>, vector<1x32x4xf32>, vector<1x32x4xf32> -> vector<1x32x32xf32>
    %115 = vector.shape_cast %114 : vector<1x32x32xf32> to vector<32x32xf32>
    %116 = arith.truncf %115 : vector<32x32xf32> to vector<32x32xbf16>
    %c0_8 = arith.constant 0 : index
    %c0_9 = arith.constant 0 : index
    %117 = vector.load %arg3[%c0_8, %c0_9] : memref<32x32xbf16, #tpu.memory_space<vmem>>, vector<32x32xbf16>
    %cst_10 = arith.constant dense<0.000000e+00> : vector<32x32xf32>
    %118 = tpu.matmul %116, %117, %cst_10 {dimension_numbers = #tpu.dot_dimension_numbers<[1], [0], [0], [1], [0, 0, 1, 1], [], []>} : vector<32x32xbf16>, vector<32x32xbf16>, vector<32x32xf32> -> vector<32x32xf32>
    %c0_11 = arith.constant 0 : index
    %c0_12 = arith.constant 0 : index
    %119 = vector.load %arg4[%c0_11, %c0_12] : memref<1x32xf32, #tpu.memory_space<vmem>>, vector<1x32xf32>
    %120 = vector.broadcast %119 : vector<1x32xf32> to vector<32x32xf32>
    %121 = arith.addf %118, %120 : vector<32x32xf32>
    %122 = vector.shape_cast %121 : vector<32x32xf32> to vector<1x32x32xf32>
    %c0_13 = arith.constant 0 : index
    %c0_14 = arith.constant 0 : index
    %c0_15 = arith.constant 0 : index
    %123 = vector.load %arg5[%c0_13, %c0_14, %c0_15] : memref<1x32x32xf32, #tpu.memory_space<vmem>>, vector<1x32x32xf32>
    tpu.vector_store %arg5[%c0_13, %c0_14, %c0_15], %122 {strides = array<i32>} : memref<1x32x32xf32, #tpu.memory_space<vmem>>, vector<1x32x32xf32>,
    return
  }
  func.func @transform_0(%arg0: i32) -> (i32, i32, i32) {
    %c0_i32 = arith.constant 0 : i32
    %c0_i32_0 = arith.constant 0 : i32
    %c0_i32_1 = arith.constant 0 : i32
    return %arg0, %c0_i32, %c0_i32_0 : i32, i32, i32
  }
  func.func @transform_1(%arg0: i32) -> (i32, i32) {
    %c0_i32 = arith.constant 0 : i32
    %c0_i32_0 = arith.constant 0 : i32
    %c0_i32_1 = arith.constant 0 : i32
    return %c0_i32, %c0_i32_0 : i32, i32
  }
  func.func @transform_2(%arg0: i32) -> (i32, i32) {
    %c0_i32 = arith.constant 0 : i32
    %c0_i32_0 = arith.constant 0 : i32
    %c0_i32_1 = arith.constant 0 : i32
    return %c0_i32, %c0_i32_0 : i32, i32
  }
  func.func @transform_3(%arg0: i32) -> (i32, i32) {
    %c0_i32 = arith.constant 0 : i32
    %c0_i32_0 = arith.constant 0 : i32
    %c0_i32_1 = arith.constant 0 : i32
    return %c0_i32, %c0_i32_0 : i32, i32
  }
  func.func @transform_4(%arg0: i32) -> (i32, i32, i32) {
    %c0_i32 = arith.constant 0 : i32
    %c0_i32_0 = arith.constant 0 : i32
    %c0_i32_1 = arith.constant 0 : i32
    return %arg0, %c0_i32, %c0_i32_0 : i32, i32, i32
  }
}

</mosaic_0001>

<llo_original>
// kernel: tpu_custom_call.1
$region0: #{tpu_custom_call.1}
  #allocation0 [shape = 'u32[]', space=smem, size = 0x4, offset = 0x4, fixed_abs, tag = 'smem constant byte address 0x4 - core index']
  #allocation1 [shape = 'u32[144,128]{1,0:T(1,128)}', space=vmem, size = 0x12000, scoped, tag = 'internal scratch']
  %s0 = inlined_call_operand.hbm [shape: f32[2,32,32], index: 0, kind: input, shape index: {}]
  %s1 = inlined_call_operand.hbm [shape: bf16[32,96], index: 1, kind: input, shape index: {}]
  %s2 = inlined_call_operand.hbm [shape: bf16[32,32], index: 2, kind: input, shape index: {}]
  %s3 = inlined_call_operand.vmem [shape: f32[1,32], index: 3, kind: input, shape index: {}]
  %s4 = inlined_call_operand.hbm [shape: f32[2,32,32], index: 4, kind: output, shape index: {}]
  %s5 = sld [smem:[#allocation0]]
  $region61: #{tpu_custom_call.1} parent=0
    _
  %s7 = ssub.s32 1, %s5
  %s8 = scalar_select 0, %s7, %s5
  $region1: #{tpu_custom_call.1} parent=0
    #allocation2 [shape = 'u8[32768]{0}', space=vmem, size = 0x8000, scoped, tag = 'input window, operand 0']
    #allocation3 [shape = 's32[2]{0}', space=sflag, size = 0x8, scoped, tag = 'scoped memory for tpu_custom_call.1']
    #allocation4 [shape = 's32[2]{0}', space=sflag, size = 0x8, scoped, tag = 'scoped memory for tpu_custom_call.1']
    #allocation5 [shape = 'u8[8192]{0}', space=vmem, size = 0x2000, scoped, tag = 'input window, operand 1, single buffered']
    #allocation6 [shape = 's32[1]{0}', space=sflag, size = 0x4, scoped, tag = 'scoped memory for tpu_custom_call.1']
    #allocation7 [shape = 'u8[8192]{0}', space=vmem, size = 0x2000, scoped, tag = 'input window, operand 2, single buffered']
    #allocation8 [shape = 'u8[32768]{0}', space=vmem, size = 0x8000, scoped, tag = 'output window, operand 0']
    %9 = vsyncpa [#allocation3], 0
    %s10 = scalar_lea.sflag [#allocation3], 1
    %11 = vsyncpa %s10, 0
    %12 = vsyncpa [#allocation6], 0
    %13 = vsyncpa [#allocation4], 0
    %s14 = scalar_lea.sflag [#allocation4], 1
    %15 = vsyncpa %s14, 0
    loop: start=0, step=1, limit=4
    $region2: #{tpu_custom_call.1} parent=1 // loop_pre_header
      _
    $region3: #{tpu_custom_call.1} parent=1 // loop_header
      %s17 = sphi 0, %s21
      %p18 = scmp.ge.s32.totalorder %s17, 4
      %s27 = sphi 0, %s29
      %s30 = sphi 0, %s27
      %s31 = sphi 0, %s30
      %s47 = sphi 0, %s31
      %s51 = sphi 0, %s51
      %s53 = sphi 0, %s51
      %s54 = sphi 0, %s53
      %s68 = sphi 0, %s54
      %s72 = sphi 0, %s72
      %s74 = sphi 0, %s72
      %s75 = sphi 0, %s74
      %s89 = sphi 0, %s75
      %s93 = sphi 0, %s93
      %s95 = sphi 0, %s93
      %s96 = sphi 0, %s95
      %s110 = sphi 0, %s96
      %s116 = sphi 0, %s118
      %s119 = sphi 0, %s116
      %s120 = sphi 0, %s119
      %s136 = sphi 0, %s120
    $region4: #{tpu_custom_call.1} parent=1 // loop_header_branch
      %20 = sbr.rel (%p18) target = $region8
    $region5: #{tpu_custom_call.1} parent=1 // loop_body
      %s22 = ssub.s32 %s17, 1
      %s23 = ssub.s32 %s17, 2
      %s24 = sadd.s32 %s17, 1
      %s25 = ssub.s32 %s17, %s24
      %p26 = scmp.eq.s32.totalorder %s25, 0
      %s28 = sadd.s32 %s27, 1
      %s29 = scalar_select %p26, %s27, %s28
      %p32 = pneg %p26
      %p33 = scmp.eq.s32.totalorder %s17, 1
      %p34 = por %p32, %p33
      %p35 = scmp.ne.s32.totalorder %s27, %s30
      %p36 = scmp.eq.s32.totalorder %s17, 0
      %p37 = por %p35, %p36
      %p38 = scmp.ne.s32.totalorder %s27, %s30
      %p39 = scmp.eq.s32.totalorder %s22, 1
      %p40 = por %p38, %p39
      %p41 = scmp.ne.s32.totalorder %s30, %s31
      %p42 = scmp.eq.s32.totalorder %s22, 0
      %p43 = por %p41, %p42
      %p44 = scmp.ne.s32.totalorder %s30, %s31
      %p45 = scmp.eq.s32.totalorder %s23, 1
      %p46 = por %p44, %p45
      %p48 = scmp.ne.s32.totalorder %s31, %s47
      %p49 = scmp.eq.s32.totalorder %s23, 0
      %p50 = por %p48, %p49
      %s52 = sadd.s32 %s51, 1
      %p55 = scmp.eq.s32.totalorder %s17, 1
      %p56 = scmp.ne.s32.totalorder %s51, %s53
      %p57 = scmp.eq.s32.totalorder %s17, 0
      %p58 = por %p56, %p57
      %p59 = scmp.ne.s32.totalorder %s51, %s53
      %p60 = scmp.eq.s32.totalorder %s22, 1
      %p61 = por %p59, %p60
      %p62 = scmp.ne.s32.totalorder %s53, %s54
      %p63 = scmp.eq.s32.totalorder %s22, 0
      %p64 = por %p62, %p63
      %p65 = scmp.ne.s32.totalorder %s53, %s54
      %p66 = scmp.eq.s32.totalorder %s23, 1
      %p67 = por %p65, %p66
      %p69 = scmp.ne.s32.totalorder %s54, %s68
      %p70 = scmp.eq.s32.totalorder %s23, 0
      %p71 = por %p69, %p70
      %s73 = sadd.s32 %s72, 1
      %p76 = scmp.eq.s32.totalorder %s17, 1
      %p77 = scmp.ne.s32.totalorder %s72, %s74
      %p78 = scmp.eq.s32.totalorder %s17, 0
      %p79 = por %p77, %p78
      %p80 = scmp.ne.s32.totalorder %s72, %s74
      %p81 = scmp.eq.s32.totalorder %s22, 1
      %p82 = por %p80, %p81
      %p83 = scmp.ne.s32.totalorder %s74, %s75
      %p84 = scmp.eq.s32.totalorder %s22, 0
      %p85 = por %p83, %p84
      %p86 = scmp.ne.s32.totalorder %s74, %s75
      %p87 = scmp.eq.s32.totalorder %s23, 1
      %p88 = por %p86, %p87
      %p90 = scmp.ne.s32.totalorder %s75, %s89
      %p91 = scmp.eq.s32.totalorder %s23, 0
      %p92 = por %p90, %p91
      %s94 = sadd.s32 %s93, 1
      %p97 = scmp.eq.s32.totalorder %s17, 1
      %p98 = scmp.ne.s32.totalorder %s93, %s95
      %p99 = scmp.eq.s32.totalorder %s17, 0
      %p100 = por %p98, %p99
      %p101 = scmp.ne.s32.totalorder %s93, %s95
      %p102 = scmp.eq.s32.totalorder %s22, 1
      %p103 = por %p101, %p102
      %p104 = scmp.ne.s32.totalorder %s95, %s96
      %p105 = scmp.eq.s32.totalorder %s22, 0
      %p106 = por %p104, %p105
      %p107 = scmp.ne.s32.totalorder %s95, %s96
      %p108 = scmp.eq.s32.totalorder %s23, 1
      %p109 = por %p107, %p108
      %p111 = scmp.ne.s32.totalorder %s96, %s110
      %p112 = scmp.eq.s32.totalorder %s23, 0
      %p113 = por %p111, %p112
      %s114 = ssub.s32 %s17, %s24
      %p115 = scmp.eq.s32.totalorder %s114, 0
      %s117 = sadd.s32 %s116, 1
      %s118 = scalar_select %p115, %s116, %s117
      %p121 = pneg %p115
      %p122 = scmp.eq.s32.totalorder %s17, 1
      %p123 = por %p121, %p122
      %p124 = scmp.ne.s32.totalorder %s116, %s119
      %p125 = scmp.eq.s32.totalorder %s17, 0
      %p126 = por %p124, %p125
      %p127 = scmp.ne.s32.totalorder %s116, %s119
      %p128 = scmp.eq.s32.totalorder %s22, 1
      %p129 = por %p127, %p128
      %p130 = scmp.ne.s32.totalorder %s119, %s120
      %p131 = scmp.eq.s32.totalorder %s22, 0
      %p132 = por %p130, %p131
      %p133 = scmp.ne.s32.totalorder %s119, %s120
      %p134 = scmp.eq.s32.totalorder %s23, 1
      %p135 = por %p133, %p134
      %p137 = scmp.ne.s32.totalorder %s120, %s136
      %p138 = scmp.eq.s32.totalorder %s23, 0
      %p139 = por %p137, %p138
      %p140 = scmp.le.s32.totalorder 1, %s17
      %p141 = scmp.lt.s32.totalorder %s17, 3
      %p142 = pnand %p140, %p141
      %p143 = pneg %p142
      // Predicated region
      $region9: #{tpu_custom_call.1} parent=5 // pred_check
        _
      $region10: #{tpu_custom_call.1} parent=5 // pred_check_branch
        %145 = sbr.rel (%p142) target = $region12
      $region11: #{tpu_custom_call.1} parent=5 // pred_region
        %s146 = ssub.s32 %s17, 1
        // Predicated region
        $region13: #{tpu_custom_call.1} parent=11 // pred_check
          %p147 = pneg %p64
        $region14: #{tpu_custom_call.1} parent=11 // pred_check_branch
          %149 = sbr.rel (%p147) target = $region16
        $region15: #{tpu_custom_call.1} parent=11 // pred_region
          %s151 = ssub.s32 256, 256
          %152 = vsyncadd [#allocation6], %s151
          %s153 = sshll.u32 [#allocation5], 4
          %s154 = int_to_ptr.vmem [resolvable:$true] %s153
          %159 = dma.hbm_to_vmem [thread:$0]  %s1, 256, %s154, [#allocation6], 64, 64, 4
        $region16: #{tpu_custom_call.1} parent=11 // pred_fallthru
          _
        // Predicated region
        $region17: #{tpu_custom_call.1} parent=11 // pred_check
          %p160 = pneg %p85
        $region18: #{tpu_custom_call.1} parent=11 // pred_check_branch
          %162 = sbr.rel (%p160) target = $region20
        $region19: #{tpu_custom_call.1} parent=11 // pred_region
          %s164 = ssub.s32 256, 256
          %165 = vsyncadd [#allocation6], %s164
          %s166 = sshll.u32 [#allocation7], 4
          %s167 = int_to_ptr.vmem [resolvable:$true] %s166
          %172 = dma.hbm_to_vmem [thread:$0]  %s2, 256, %s167, [#allocation6], 64, 64, 4
        $region20: #{tpu_custom_call.1} parent=11 // pred_fallthru
          _
        // Predicated region
        $region21: #{tpu_custom_call.1} parent=11 // pred_check
          %p173 = pneg %p106
        $region22: #{tpu_custom_call.1} parent=11 // pred_check_branch
          %175 = sbr.rel (%p173) target = $region24
        $region23: #{tpu_custom_call.1} parent=11 // pred_region
          _
        $region24: #{tpu_custom_call.1} parent=11 // pred_fallthru
          _
      $region12: #{tpu_custom_call.1} parent=5 // pred_fallthru
        _
      %p176 = scmp.lt.s32.totalorder %s17, 2
      // Predicated region
      $region25: #{tpu_custom_call.1} parent=5 // pred_check
        %p177 = pneg %p176
      $region26: #{tpu_custom_call.1} parent=5 // pred_check_branch
        %179 = sbr.rel (%p177) target = $region28
      $region27: #{tpu_custom_call.1} parent=5 // pred_region
        // Predicated region
        $region29: #{tpu_custom_call.1} parent=27 // pred_check
          %p180 = pneg %p37
        $region30: #{tpu_custom_call.1} parent=27 // pred_check_branch
          %182 = sbr.rel (%p180) target = $region32
        $region31: #{tpu_custom_call.1} parent=27 // pred_region
          %s183 = sand.u32 %s27, 1
          %s184 = scalar_lea.sflag [#allocation3], %s183
          %s185 = sand.u32 %s27, 1
          %s186 = smul.addr %s185, 32
          %s187 = scalar_lea.vmem [#allocation2], %s186
          %s189 = ssub.s32 512, 512
          %190 = vsyncadd %s184, %s189
          %s191 = smul.addr %s17, 4
          %s192 = smul.addr %s191, 128
          %s193 = scalar_lea.hbm %s0, %s192
          %s194 = sshll.u32 %s187, 4
          %s195 = int_to_ptr.vmem [resolvable:$true] %s194
          %200 = dma.hbm_to_vmem [thread:$0]  %s193, 512, %s195, %s184, 128, 128, 8
        $region32: #{tpu_custom_call.1} parent=27 // pred_fallthru
          _
      $region28: #{tpu_custom_call.1} parent=5 // pred_fallthru
        _
      %p201 = scmp.le.s32.totalorder 1, %s17
      %p202 = scmp.lt.s32.totalorder %s17, 3
      %p203 = pnand %p201, %p202
      %p204 = pneg %p203
      // Predicated region
      $region33: #{tpu_custom_call.1} parent=5 // pred_check
        _
      $region34: #{tpu_custom_call.1} parent=5 // pred_check_branch
        %206 = sbr.rel (%p203) target = $region36
      $region35: #{tpu_custom_call.1} parent=5 // pred_region
        %s207 = ssub.s32 %s17, 1
        %s208 = sand.u32 %s30, 1
        %s209 = scalar_lea.sflag [#allocation3], %s208
        %s210 = sand.u32 %s30, 1
        %s211 = smul.addr %s210, 32
        %s212 = scalar_lea.vmem [#allocation2], %s211
        // Predicated region
        $region37: #{tpu_custom_call.1} parent=35 // pred_check
          %p213 = pneg %p43
        $region38: #{tpu_custom_call.1} parent=35 // pred_check_branch
          %215 = sbr.rel (%p213) target = $region40
        $region39: #{tpu_custom_call.1} parent=35 // pred_region
          %216 = dma.done %s209, 512
        $region40: #{tpu_custom_call.1} parent=35 // pred_fallthru
          _
        // Predicated region
        $region41: #{tpu_custom_call.1} parent=35 // pred_check
          %p217 = pneg %p64
        $region42: #{tpu_custom_call.1} parent=35 // pred_check_branch
          %219 = sbr.rel (%p217) target = $region44
        $region43: #{tpu_custom_call.1} parent=35 // pred_region
          %220 = dma.done [#allocation6], 256
        $region44: #{tpu_custom_call.1} parent=35 // pred_fallthru
          _
        // Predicated region
        $region45: #{tpu_custom_call.1} parent=35 // pred_check
          %p221 = pneg %p85
        $region46: #{tpu_custom_call.1} parent=35 // pred_check_branch
          %223 = sbr.rel (%p221) target = $region48
        $region47: #{tpu_custom_call.1} parent=35 // pred_region
          %224 = dma.done [#allocation6], 256
        $region48: #{tpu_custom_call.1} parent=35 // pred_fallthru
          _
        %s225 = sand.u32 %s30, 1
        %s226 = scalar_lea.sflag [#allocation3], %s225
        %s227 = sand.u32 %s30, 1
        %s228 = smul.addr %s227, 32
        %s229 = scalar_lea.vmem [#allocation2], %s228
        %p230 = pneg %p43
        %p231 = pneg %p40
        %p232 = pneg %p64
        %p233 = pneg %p61
        %p234 = pneg %p85
        %p235 = pneg %p82
        %p236 = pneg %p106
        %p237 = pneg %p103
        %p238 = pneg %p132
        %p239 = pneg %p129
        %s240 = sand.u32 %s119, 1
        %s241 = scalar_lea.sflag [#allocation4], %s240
        %s242 = sand.u32 %s119, 1
        %s243 = smul.addr %s242, 32
        %s244 = scalar_lea.vmem [#allocation8], %s243
        %v246 = vld [vmem:[%s212] sm:$0xff]
        %v247 = vld [vmem:[%s212 + $0x8] sm:$0xff]
        %v248 = vld [vmem:[%s212 + $0x10] sm:$0xff]
        %v249 = vld [vmem:[%s212 + $0x18] sm:$0xff]
        %v250 = vpack.c.bf16 %v247, %v246
        %v251 = vpack.c.bf16 %v249, %v248
        %v252 = vld [vmem:[#allocation5] sm:$0xf]
        %v253 = vld [vmem:[#allocation5 + $0x4] sm:$0xf]
        %v254 = vld [vmem:[#allocation5 + $0x8] sm:$0xf]
        %v255 = vld [vmem:[#allocation5 + $0xc] sm:$0xf]
        %v260 = vunpack.c.l.b16 %v252
        %v261 = vunpack.c.l.b16 %v253
        %v262 = vunpack.c.l.b16 %v254
        %v263 = vunpack.c.l.b16 %v255
        %v264 = vpack.c.b16 %v261, %v260
        %v265 = vpack.c.b16 %v263, %v262
        %vm268 = vcmask 261120
        %v270 = vsel %vm268, %v250, 0
        %v273 = vsel %vm268, %v251, 0
        %275 = vmatprep.subr.bf16.mxu0 0
        %276 = vmatpush1.bf16.msra.mxu0 0
        %277 = vmatprep.subr.bf16.mxu0 0
        %278 = vmatpush1.bf16.msra.mxu0 0
        %279 = vmatprep.subr.bf16.mxu0 0
        %280 = vmatpush1.bf16.msra.mxu0 0
        %281 = vmatprep.subr.bf16.mxu0 0
        %282 = vmatpush1.bf16.msra.mxu0 0
        %283 = vmatprep.subr.bf16.mxu0 0
        %284 = vmatpush1.bf16.msra.mxu0 0
        %285 = vmatprep.subr.bf16.mxu0 0
        %286 = vmatpush1.bf16.msra.mxu0 0
        %287 = vmatprep.subr.bf16.mxu0 0
        %288 = vmatpush1.bf16.msra.mxu0 %v265
        %289 = vmatprep.subr.bf16.mxu0 0
        %290 = vmatpush1.bf16.msra.mxu0 %v264
        %291 = vmatprep.subr.bf16.mxu0 0
        %292 = vmatpush2.bf16.msra.mxu0 0
        %293 = vmatprep.subr.bf16.mxu0 0
        %294 = vmatpush2.bf16.msra.mxu0 0
        %295 = vmatprep.subr.bf16.mxu0 0
        %296 = vmatpush2.bf16.msra.mxu0 0
        %297 = vmatprep.subr.bf16.mxu0 0
        %298 = vmatpush2.bf16.msra.mxu0 0
        %299 = vmatprep.subr.bf16.mxu0 0
        %300 = vmatpush2.bf16.msra.mxu0 0
        %301 = vmatprep.subr.bf16.mxu0 0
        %302 = vmatpush2.bf16.msra.mxu0 0
        %303 = vmatprep.subr.bf16.mxu0 0
        %304 = vmatpush2.bf16.msra.mxu0 0
        %305 = vmatprep.subr.bf16.mxu0 0
        %306 = vmatpush2.bf16.msra.mxu0 0
        %307 = vmatprep.mubr.bf16.mxu0 0
        %308 = vmatmul.mubr.bf16.gmra.mxu0 %v270
        %v309 = vpop.f32.mrf.mxu0
        %v310 = vadd.f32 0.0, %v309
        %v311 = vpop.f32.mrf.mxu0
        %v312 = vpop.f32.mrf.mxu0
        %v313 = vadd.f32 0.0, %v312
        %v314 = vpop.f32.mrf.mxu0
        %315 = vmatprep.mubr.bf16.mxu0 0
        %316 = vmatmul.mubr.bf16.gmra.mxu0 %v273
        %v317 = vpop.f32.mrf.mxu0
        %v318 = vadd.f32 0.0, %v317
        %v319 = vpop.f32.mrf.mxu0
        %v320 = vpop.f32.mrf.mxu0
        %v321 = vadd.f32 0.0, %v320
        %v322 = vpop.f32.mrf.mxu0
        %323 = vdwg.mxu0
        %v324 = vpack.c.bf16 %v313, %v310
        %v325 = vpack.c.bf16 %v321, %v318
        %328 = vrot.lane.b32.xlu0 %v324, 124
        %v329 = vpop.permute.xlu0 %328
        %330 = vrot.lane.b32.xlu0 %v325, 124
        %v331 = vpop.permute.xlu0 %330
        %332 = vrot.lane.b32.xlu0 %v324, 120
        %v333 = vpop.permute.xlu0 %332
        %334 = vrot.lane.b32.xlu0 %v325, 120
        %v335 = vpop.permute.xlu0 %334
        %336 = vrot.lane.b32.xlu0 %v324, 116
        %v337 = vpop.permute.xlu0 %336
        %338 = vrot.lane.b32.xlu0 %v325, 116
        %v339 = vpop.permute.xlu0 %338
        %340 = vrot.lane.b32.xlu0 %v324, 112
        %v341 = vpop.permute.xlu0 %340
        %342 = vrot.lane.b32.xlu0 %v325, 112
        %v343 = vpop.permute.xlu0 %342
        %344 = vrot.lane.b32.xlu0 %v324, 108
        %v345 = vpop.permute.xlu0 %344
        %346 = vrot.lane.b32.xlu0 %v325, 108
        %v347 = vpop.permute.xlu0 %346
        %348 = vrot.lane.b32.xlu0 %v324, 104
        %v349 = vpop.permute.xlu0 %348
        %350 = vrot.lane.b32.xlu0 %v325, 104
        %v351 = vpop.permute.xlu0 %350
        %352 = vrot.lane.b32.xlu0 %v324, 100
        %v353 = vpop.permute.xlu0 %352
        %354 = vrot.lane.b32.xlu0 %v325, 100
        %v355 = vpop.permute.xlu0 %354
        %356 = vrot.lane.b32.xlu0 %v324, 96
        %v357 = vpop.permute.xlu0 %356
        %358 = vrot.lane.b32.xlu0 %v325, 96
        %v359 = vpop.permute.xlu0 %358
        %vm360 = vcmask 31744
        %v362 = vsel %vm360, %v324, 0
        %v365 = vsel %vm360, %v325, 0
        %v368 = vsel %vm360, %v357, 0
        %v371 = vsel %vm360, %v359, 0
        %373 = vmatprep.subr.bf16.mxu0 0
        %374 = vmatpush1.bf16.xpose.msra.mxu0 0
        %375 = vmatprep.subr.bf16.mxu0 0
        %376 = vmatpush1.bf16.xpose.msra.mxu0 0
        %377 = vmatprep.subr.bf16.mxu0 0
        %378 = vmatpush1.bf16.xpose.msra.mxu0 0
        %379 = vmatprep.subr.bf16.mxu0 0
        %380 = vmatpush1.bf16.xpose.msra.mxu0 0
        %381 = vmatprep.subr.bf16.mxu0 0
        %382 = vmatpush1.bf16.xpose.msra.mxu0 0
        %383 = vmatprep.subr.bf16.mxu0 0
        %384 = vmatpush1.bf16.xpose.msra.mxu0 0
        %385 = vmatprep.subr.bf16.mxu0 0
        %386 = vmatpush1.bf16.xpose.msra.mxu0 %v371
        %387 = vmatprep.subr.bf16.mxu0 0
        %388 = vmatpush1.bf16.xpose.msra.mxu0 %v368
        %389 = vmatprep.subr.bf16.mxu0 0
        %390 = vmatpush2.bf16.xpose.msra.mxu0 0
        %391 = vmatprep.subr.bf16.mxu0 0
        %392 = vmatpush2.bf16.xpose.msra.mxu0 0
        %393 = vmatprep.subr.bf16.mxu0 0
        %394 = vmatpush2.bf16.xpose.msra.mxu0 0
        %395 = vmatprep.subr.bf16.mxu0 0
        %396 = vmatpush2.bf16.xpose.msra.mxu0 0
        %397 = vmatprep.subr.bf16.mxu0 0
        %398 = vmatpush2.bf16.xpose.msra.mxu0 0
        %399 = vmatprep.subr.bf16.mxu0 0
        %400 = vmatpush2.bf16.xpose.msra.mxu0 0
        %401 = vmatprep.subr.bf16.mxu0 0
        %402 = vmatpush2.bf16.xpose.msra.mxu0 0
        %403 = vmatprep.subr.bf16.mxu0 0
        %404 = vmatpush2.bf16.xpose.msra.mxu0 0
        %405 = vmatprep.mubr.bf16.mxu0 0
        %406 = vmatmul.mubr.bf16.gmra.mxu0 %v362
        %v407 = vpop.f32.mrf.mxu0
        %v408 = vadd.f32 0.0, %v407
        %v409 = vpop.f32.mrf.mxu0
        %v410 = vpop.f32.mrf.mxu0
        %v411 = vadd.f32 0.0, %v410
        %v412 = vpop.f32.mrf.mxu0
        %413 = vmatprep.mubr.bf16.mxu0 0
        %414 = vmatmul.mubr.bf16.gmra.mxu0 %v365
        %v415 = vpop.f32.mrf.mxu0
        %v416 = vadd.f32 0.0, %v415
        %v417 = vpop.f32.mrf.mxu0
        %v418 = vpop.f32.mrf.mxu0
        %v419 = vadd.f32 0.0, %v418
        %v420 = vpop.f32.mrf.mxu0
        %421 = vdwg.mxu0
        %422 = vrot.lane.b32.xlu0 %v329, 96
        %v423 = vpop.permute.xlu0 %422
        %424 = vrot.lane.b32.xlu0 %v331, 96
        %v425 = vpop.permute.xlu0 %424
        %v427 = vsel %vm360, %v329, 0
        %v430 = vsel %vm360, %v331, 0
        %v433 = vsel %vm360, %v423, 0
        %v436 = vsel %vm360, %v425, 0
        %438 = vmatprep.subr.bf16.mxu0 0
        %439 = vmatpush1.bf16.xpose.msra.mxu0 0
        %440 = vmatprep.subr.bf16.mxu0 0
        %441 = vmatpush1.bf16.xpose.msra.mxu0 0
        %442 = vmatprep.subr.bf16.mxu0 0
        %443 = vmatpush1.bf16.xpose.msra.mxu0 0
        %444 = vmatprep.subr.bf16.mxu0 0
        %445 = vmatpush1.bf16.xpose.msra.mxu0 0
        %446 = vmatprep.subr.bf16.mxu0 0
        %447 = vmatpush1.bf16.xpose.msra.mxu0 0
        %448 = vmatprep.subr.bf16.mxu0 0
        %449 = vmatpush1.bf16.xpose.msra.mxu0 0
        %450 = vmatprep.subr.bf16.mxu0 0
        %451 = vmatpush1.bf16.xpose.msra.mxu0 %v436
        %452 = vmatprep.subr.bf16.mxu0 0
        %453 = vmatpush1.bf16.xpose.msra.mxu0 %v433
        %454 = vmatprep.subr.bf16.mxu0 0
        %455 = vmatpush2.bf16.xpose.msra.mxu0 0
        %456 = vmatprep.subr.bf16.mxu0 0
        %457 = vmatpush2.bf16.xpose.msra.mxu0 0
        %458 = vmatprep.subr.bf16.mxu0 0
        %459 = vmatpush2.bf16.xpose.msra.mxu0 0
        %460 = vmatprep.subr.bf16.mxu0 0
        %461 = vmatpush2.bf16.xpose.msra.mxu0 0
        %462 = vmatprep.subr.bf16.mxu0 0
        %463 = vmatpush2.bf16.xpose.msra.mxu0 0
        %464 = vmatprep.subr.bf16.mxu0 0
        %465 = vmatpush2.bf16.xpose.msra.mxu0 0
        %466 = vmatprep.subr.bf16.mxu0 0
        %467 = vmatpush2.bf16.xpose.msra.mxu0 0
        %468 = vmatprep.subr.bf16.mxu0 0
        %469 = vmatpush2.bf16.xpose.msra.mxu0 0
        %470 = vmatprep.mubr.bf16.mxu0 0
        %471 = vmatmul.mubr.bf16.gmra.mxu0 %v427
        %v472 = vpop.f32.mrf.mxu0
        %v473 = vadd.f32 0.0, %v472
        %v474 = vpop.f32.mrf.mxu0
        %v475 = vpop.f32.mrf.mxu0
        %v476 = vadd.f32 0.0, %v475
        %v477 = vpop.f32.mrf.mxu0
        %478 = vmatprep.mubr.bf16.mxu0 0
        %479 = vmatmul.mubr.bf16.gmra.mxu0 %v430
        %v480 = vpop.f32.mrf.mxu0
        %v481 = vadd.f32 0.0, %v480
        %v482 = vpop.f32.mrf.mxu0
        %v483 = vpop.f32.mrf.mxu0
        %v484 = vadd.f32 0.0, %v483
        %v485 = vpop.f32.mrf.mxu0
        %486 = vdwg.mxu0
        %487 = vrot.lane.b32.xlu0 %v333, 96
        %v488 = vpop.permute.xlu0 %487
        %489 = vrot.lane.b32.xlu0 %v335, 96
        %v490 = vpop.permute.xlu0 %489
        %v492 = vsel %vm360, %v333, 0
        %v495 = vsel %vm360, %v335, 0
        %v498 = vsel %vm360, %v488, 0
        %v501 = vsel %vm360, %v490, 0
        %503 = vmatprep.subr.bf16.mxu0 0
        %504 = vmatpush1.bf16.xpose.msra.mxu0 0
        %505 = vmatprep.subr.bf16.mxu0 0
        %506 = vmatpush1.bf16.xpose.msra.mxu0 0
        %507 = vmatprep.subr.bf16.mxu0 0
        %508 = vmatpush1.bf16.xpose.msra.mxu0 0
        %509 = vmatprep.subr.bf16.mxu0 0
        %510 = vmatpush1.bf16.xpose.msra.mxu0 0
        %511 = vmatprep.subr.bf16.mxu0 0
        %512 = vmatpush1.bf16.xpose.msra.mxu0 0
        %513 = vmatprep.subr.bf16.mxu0 0
        %514 = vmatpush1.bf16.xpose.msra.mxu0 0
        %515 = vmatprep.subr.bf16.mxu0 0
        %516 = vmatpush1.bf16.xpose.msra.mxu0 %v501
        %517 = vmatprep.subr.bf16.mxu0 0
        %518 = vmatpush1.bf16.xpose.msra.mxu0 %v498
        %519 = vmatprep.subr.bf16.mxu0 0
        %520 = vmatpush2.bf16.xpose.msra.mxu0 0
        %521 = vmatprep.subr.bf16.mxu0 0
        %522 = vmatpush2.bf16.xpose.msra.mxu0 0
        %523 = vmatprep.subr.bf16.mxu0 0
        %524 = vmatpush2.bf16.xpose.msra.mxu0 0
        %525 = vmatprep.subr.bf16.mxu0 0
        %526 = vmatpush2.bf16.xpose.msra.mxu0 0
        %527 = vmatprep.subr.bf16.mxu0 0
        %528 = vmatpush2.bf16.xpose.msra.mxu0 0
        %529 = vmatprep.subr.bf16.mxu0 0
        %530 = vmatpush2.bf16.xpose.msra.mxu0 0
        %531 = vmatprep.subr.bf16.mxu0 0
        %532 = vmatpush2.bf16.xpose.msra.mxu0 0
        %533 = vmatprep.subr.bf16.mxu0 0
        %534 = vmatpush2.bf16.xpose.msra.mxu0 0
        %535 = vmatprep.mubr.bf16.mxu0 0
        %536 = vmatmul.mubr.bf16.gmra.mxu0 %v492
        %v537 = vpop.f32.mrf.mxu0
        %v538 = vadd.f32 0.0, %v537
        %v539 = vpop.f32.mrf.mxu0
        %v540 = vpop.f32.mrf.mxu0
        %v541 = vadd.f32 0.0, %v540
        %v542 = vpop.f32.mrf.mxu0
        %543 = vmatprep.mubr.bf16.mxu0 0
        %544 = vmatmul.mubr.bf16.gmra.mxu0 %v495
        %v545 = vpop.f32.mrf.mxu0
        %v546 = vadd.f32 0.0, %v545
        %v547 = vpop.f32.mrf.mxu0
        %v548 = vpop.f32.mrf.mxu0
        %v549 = vadd.f32 0.0, %v548
        %v550 = vpop.f32.mrf.mxu0
        %551 = vdwg.mxu0
        %552 = vrot.lane.b32.xlu0 %v337, 96
        %v553 = vpop.permute.xlu0 %552
        %554 = vrot.lane.b32.xlu0 %v339, 96
        %v555 = vpop.permute.xlu0 %554
        %v557 = vsel %vm360, %v337, 0
        %v560 = vsel %vm360, %v339, 0
        %v563 = vsel %vm360, %v553, 0
        %v566 = vsel %vm360, %v555, 0
        %568 = vmatprep.subr.bf16.mxu0 0
        %569 = vmatpush1.bf16.xpose.msra.mxu0 0
        %570 = vmatprep.subr.bf16.mxu0 0
        %571 = vmatpush1.bf16.xpose.msra.mxu0 0
        %572 = vmatprep.subr.bf16.mxu0 0
        %573 = vmatpush1.bf16.xpose.msra.mxu0 0
        %574 = vmatprep.subr.bf16.mxu0 0
        %575 = vmatpush1.bf16.xpose.msra.mxu0 0
        %576 = vmatprep.subr.bf16.mxu0 0
        %577 = vmatpush1.bf16.xpose.msra.mxu0 0
        %578 = vmatprep.subr.bf16.mxu0 0
        %579 = vmatpush1.bf16.xpose.msra.mxu0 0
        %580 = vmatprep.subr.bf16.mxu0 0
        %581 = vmatpush1.bf16.xpose.msra.mxu0 %v566
        %582 = vmatprep.subr.bf16.mxu0 0
        %583 = vmatpush1.bf16.xpose.msra.mxu0 %v563
        %584 = vmatprep.subr.bf16.mxu0 0
        %585 = vmatpush2.bf16.xpose.msra.mxu0 0
        %586 = vmatprep.subr.bf16.mxu0 0
        %587 = vmatpush2.bf16.xpose.msra.mxu0 0
        %588 = vmatprep.subr.bf16.mxu0 0
        %589 = vmatpush2.bf16.xpose.msra.mxu0 0
        %590 = vmatprep.subr.bf16.mxu0 0
        %591 = vmatpush2.bf16.xpose.msra.mxu0 0
        %592 = vmatprep.subr.bf16.mxu0 0
        %593 = vmatpush2.bf16.xpose.msra.mxu0 0
        %594 = vmatprep.subr.bf16.mxu0 0
        %595 = vmatpush2.bf16.xpose.msra.mxu0 0
        %596 = vmatprep.subr.bf16.mxu0 0
        %597 = vmatpush2.bf16.xpose.msra.mxu0 0
        %598 = vmatprep.subr.bf16.mxu0 0
        %599 = vmatpush2.bf16.xpose.msra.mxu0 0
        %600 = vmatprep.mubr.bf16.mxu0 0
        %601 = vmatmul.mubr.bf16.gmra.mxu0 %v557
        %v602 = vpop.f32.mrf.mxu0
        %v603 = vadd.f32 0.0, %v602
        %v604 = vpop.f32.mrf.mxu0
        %v605 = vpop.f32.mrf.mxu0
        %v606 = vadd.f32 0.0, %v605
        %v607 = vpop.f32.mrf.mxu0
        %608 = vmatprep.mubr.bf16.mxu0 0
        %609 = vmatmul.mubr.bf16.gmra.mxu0 %v560
        %v610 = vpop.f32.mrf.mxu0
        %v611 = vadd.f32 0.0, %v610
        %v612 = vpop.f32.mrf.mxu0
        %v613 = vpop.f32.mrf.mxu0
        %v614 = vadd.f32 0.0, %v613
        %v615 = vpop.f32.mrf.mxu0
        %616 = vdwg.mxu0
        %617 = vrot.lane.b32.xlu0 %v341, 96
        %v618 = vpop.permute.xlu0 %617
        %619 = vrot.lane.b32.xlu0 %v343, 96
        %v620 = vpop.permute.xlu0 %619
        %v622 = vsel %vm360, %v341, 0
        %v625 = vsel %vm360, %v343, 0
        %v628 = vsel %vm360, %v618, 0
        %v631 = vsel %vm360, %v620, 0
        %633 = vmatprep.subr.bf16.mxu0 0
        %634 = vmatpush1.bf16.xpose.msra.mxu0 0
        %635 = vmatprep.subr.bf16.mxu0 0
        %636 = vmatpush1.bf16.xpose.msra.mxu0 0
        %637 = vmatprep.subr.bf16.mxu0 0
        %638 = vmatpush1.bf16.xpose.msra.mxu0 0
        %639 = vmatprep.subr.bf16.mxu0 0
        %640 = vmatpush1.bf16.xpose.msra.mxu0 0
        %641 = vmatprep.subr.bf16.mxu0 0
        %642 = vmatpush1.bf16.xpose.msra.mxu0 0
        %643 = vmatprep.subr.bf16.mxu0 0
        %644 = vmatpush1.bf16.xpose.msra.mxu0 0
        %645 = vmatprep.subr.bf16.mxu0 0
        %646 = vmatpush1.bf16.xpose.msra.mxu0 %v631
        %647 = vmatprep.subr.bf16.mxu0 0
        %648 = vmatpush1.bf16.xpose.msra.mxu0 %v628
        %649 = vmatprep.subr.bf16.mxu0 0
        %650 = vmatpush2.bf16.xpose.msra.mxu0 0
        %651 = vmatprep.subr.bf16.mxu0 0
        %652 = vmatpush2.bf16.xpose.msra.mxu0 0
        %653 = vmatprep.subr.bf16.mxu0 0
        %654 = vmatpush2.bf16.xpose.msra.mxu0 0
        %655 = vmatprep.subr.bf16.mxu0 0
        %656 = vmatpush2.bf16.xpose.msra.mxu0 0
        %657 = vmatprep.subr.bf16.mxu0 0
        %658 = vmatpush2.bf16.xpose.msra.mxu0 0
        %659 = vmatprep.subr.bf16.mxu0 0
        %660 = vmatpush2.bf16.xpose.msra.mxu0 0
        %661 = vmatprep.subr.bf16.mxu0 0
        %662 = vmatpush2.bf16.xpose.msra.mxu0 0
        %663 = vmatprep.subr.bf16.mxu0 0
        %664 = vmatpush2.bf16.xpose.msra.mxu0 0
        %665 = vmatprep.mubr.bf16.mxu0 0
        %666 = vmatmul.mubr.bf16.gmra.mxu0 %v622
        %v667 = vpop.f32.mrf.mxu0
        %v668 = vadd.f32 0.0, %v667
        %v669 = vpop.f32.mrf.mxu0
        %v670 = vpop.f32.mrf.mxu0
        %v671 = vadd.f32 0.0, %v670
        %v672 = vpop.f32.mrf.mxu0
        %673 = vmatprep.mubr.bf16.mxu0 0
        %674 = vmatmul.mubr.bf16.gmra.mxu0 %v625
        %v675 = vpop.f32.mrf.mxu0
        %v676 = vadd.f32 0.0, %v675
        %v677 = vpop.f32.mrf.mxu0
        %v678 = vpop.f32.mrf.mxu0
        %v679 = vadd.f32 0.0, %v678
        %v680 = vpop.f32.mrf.mxu0
        %681 = vdwg.mxu0
        %682 = vrot.lane.b32.xlu0 %v345, 96
        %v683 = vpop.permute.xlu0 %682
        %684 = vrot.lane.b32.xlu0 %v347, 96
        %v685 = vpop.permute.xlu0 %684
        %v687 = vsel %vm360, %v345, 0
        %v690 = vsel %vm360, %v347, 0
        %v693 = vsel %vm360, %v683, 0
        %v696 = vsel %vm360, %v685, 0
        %698 = vmatprep.subr.bf16.mxu0 0
        %699 = vmatpush1.bf16.xpose.msra.mxu0 0
        %700 = vmatprep.subr.bf16.mxu0 0
        %701 = vmatpush1.bf16.xpose.msra.mxu0 0
        %702 = vmatprep.subr.bf16.mxu0 0
        %703 = vmatpush1.bf16.xpose.msra.mxu0 0
        %704 = vmatprep.subr.bf16.mxu0 0
        %705 = vmatpush1.bf16.xpose.msra.mxu0 0
        %706 = vmatprep.subr.bf16.mxu0 0
        %707 = vmatpush1.bf16.xpose.msra.mxu0 0
        %708 = vmatprep.subr.bf16.mxu0 0
        %709 = vmatpush1.bf16.xpose.msra.mxu0 0
        %710 = vmatprep.subr.bf16.mxu0 0
        %711 = vmatpush1.bf16.xpose.msra.mxu0 %v696
        %712 = vmatprep.subr.bf16.mxu0 0
        %713 = vmatpush1.bf16.xpose.msra.mxu0 %v693
        %714 = vmatprep.subr.bf16.mxu0 0
        %715 = vmatpush2.bf16.xpose.msra.mxu0 0
        %716 = vmatprep.subr.bf16.mxu0 0
        %717 = vmatpush2.bf16.xpose.msra.mxu0 0
        %718 = vmatprep.subr.bf16.mxu0 0
        %719 = vmatpush2.bf16.xpose.msra.mxu0 0
        %720 = vmatprep.subr.bf16.mxu0 0
        %721 = vmatpush2.bf16.xpose.msra.mxu0 0
        %722 = vmatprep.subr.bf16.mxu0 0
        %723 = vmatpush2.bf16.xpose.msra.mxu0 0
        %724 = vmatprep.subr.bf16.mxu0 0
        %725 = vmatpush2.bf16.xpose.msra.mxu0 0
        %726 = vmatprep.subr.bf16.mxu0 0
        %727 = vmatpush2.bf16.xpose.msra.mxu0 0
        %728 = vmatprep.subr.bf16.mxu0 0
        %729 = vmatpush2.bf16.xpose.msra.mxu0 0
        %730 = vmatprep.mubr.bf16.mxu0 0
        %731 = vmatmul.mubr.bf16.gmra.mxu0 %v687
        %v732 = vpop.f32.mrf.mxu0
        %v733 = vadd.f32 0.0, %v732
        %v734 = vpop.f32.mrf.mxu0
        %v735 = vpop.f32.mrf.mxu0
        %v736 = vadd.f32 0.0, %v735
        %v737 = vpop.f32.mrf.mxu0
        %738 = vmatprep.mubr.bf16.mxu0 0
        %739 = vmatmul.mubr.bf16.gmra.mxu0 %v690
        %v740 = vpop.f32.mrf.mxu0
        %v741 = vadd.f32 0.0, %v740
        %v742 = vpop.f32.mrf.mxu0
        %v743 = vpop.f32.mrf.mxu0
        %v744 = vadd.f32 0.0, %v743
        %v745 = vpop.f32.mrf.mxu0
        %746 = vdwg.mxu0
        %747 = vrot.lane.b32.xlu0 %v349, 96
        %v748 = vpop.permute.xlu0 %747
        %749 = vrot.lane.b32.xlu0 %v351, 96
        %v750 = vpop.permute.xlu0 %749
        %v752 = vsel %vm360, %v349, 0
        %v755 = vsel %vm360, %v351, 0
        %v758 = vsel %vm360, %v748, 0
        %v761 = vsel %vm360, %v750, 0
        %763 = vmatprep.subr.bf16.mxu0 0
        %764 = vmatpush1.bf16.xpose.msra.mxu0 0
        %765 = vmatprep.subr.bf16.mxu0 0
        %766 = vmatpush1.bf16.xpose.msra.mxu0 0
        %767 = vmatprep.subr.bf16.mxu0 0
        %768 = vmatpush1.bf16.xpose.msra.mxu0 0
        %769 = vmatprep.subr.bf16.mxu0 0
        %770 = vmatpush1.bf16.xpose.msra.mxu0 0
        %771 = vmatprep.subr.bf16.mxu0 0
        %772 = vmatpush1.bf16.xpose.msra.mxu0 0
        %773 = vmatprep.subr.bf16.mxu0 0
        %774 = vmatpush1.bf16.xpose.msra.mxu0 0
        %775 = vmatprep.subr.bf16.mxu0 0
        %776 = vmatpush1.bf16.xpose.msra.mxu0 %v761
        %777 = vmatprep.subr.bf16.mxu0 0
        %778 = vmatpush1.bf16.xpose.msra.mxu0 %v758
        %779 = vmatprep.subr.bf16.mxu0 0
        %780 = vmatpush2.bf16.xpose.msra.mxu0 0
        %781 = vmatprep.subr.bf16.mxu0 0
        %782 = vmatpush2.bf16.xpose.msra.mxu0 0
        %783 = vmatprep.subr.bf16.mxu0 0
        %784 = vmatpush2.bf16.xpose.msra.mxu0 0
        %785 = vmatprep.subr.bf16.mxu0 0
        %786 = vmatpush2.bf16.xpose.msra.mxu0 0
        %787 = vmatprep.subr.bf16.mxu0 0
        %788 = vmatpush2.bf16.xpose.msra.mxu0 0
        %789 = vmatprep.subr.bf16.mxu0 0
        %790 = vmatpush2.bf16.xpose.msra.mxu0 0
        %791 = vmatprep.subr.bf16.mxu0 0
        %792 = vmatpush2.bf16.xpose.msra.mxu0 0
        %793 = vmatprep.subr.bf16.mxu0 0
        %794 = vmatpush2.bf16.xpose.msra.mxu0 0
        %795 = vmatprep.mubr.bf16.mxu0 0
        %796 = vmatmul.mubr.bf16.gmra.mxu0 %v752
        %v797 = vpop.f32.mrf.mxu0
        %v798 = vadd.f32 0.0, %v797
        %v799 = vpop.f32.mrf.mxu0
        %v800 = vpop.f32.mrf.mxu0
        %v801 = vadd.f32 0.0, %v800
        %v802 = vpop.f32.mrf.mxu0
        %803 = vmatprep.mubr.bf16.mxu0 0
        %804 = vmatmul.mubr.bf16.gmra.mxu0 %v755
        %v805 = vpop.f32.mrf.mxu0
        %v806 = vadd.f32 0.0, %v805
        %v807 = vpop.f32.mrf.mxu0
        %v808 = vpop.f32.mrf.mxu0
        %v809 = vadd.f32 0.0, %v808
        %v810 = vpop.f32.mrf.mxu0
        %811 = vdwg.mxu0
        %812 = vrot.lane.b32.xlu0 %v353, 96
        %v813 = vpop.permute.xlu0 %812
        %814 = vrot.lane.b32.xlu0 %v355, 96
        %v815 = vpop.permute.xlu0 %814
        %v817 = vsel %vm360, %v353, 0
        %v820 = vsel %vm360, %v355, 0
        %v823 = vsel %vm360, %v813, 0
        %v826 = vsel %vm360, %v815, 0
        %828 = vmatprep.subr.bf16.mxu0 0
        %829 = vmatpush1.bf16.xpose.msra.mxu0 0
        %830 = vmatprep.subr.bf16.mxu0 0
        %831 = vmatpush1.bf16.xpose.msra.mxu0 0
        %832 = vmatprep.subr.bf16.mxu0 0
        %833 = vmatpush1.bf16.xpose.msra.mxu0 0
        %834 = vmatprep.subr.bf16.mxu0 0
        %835 = vmatpush1.bf16.xpose.msra.mxu0 0
        %836 = vmatprep.subr.bf16.mxu0 0
        %837 = vmatpush1.bf16.xpose.msra.mxu0 0
        %838 = vmatprep.subr.bf16.mxu0 0
        %839 = vmatpush1.bf16.xpose.msra.mxu0 0
        %840 = vmatprep.subr.bf16.mxu0 0
        %841 = vmatpush1.bf16.xpose.msra.mxu0 %v826
        %842 = vmatprep.subr.bf16.mxu0 0
        %843 = vmatpush1.bf16.xpose.msra.mxu0 %v823
        %844 = vmatprep.subr.bf16.mxu0 0
        %845 = vmatpush2.bf16.xpose.msra.mxu0 0
        %846 = vmatprep.subr.bf16.mxu0 0
        %847 = vmatpush2.bf16.xpose.msra.mxu0 0
        %848 = vmatprep.subr.bf16.mxu0 0
        %849 = vmatpush2.bf16.xpose.msra.mxu0 0
        %850 = vmatprep.subr.bf16.mxu0 0
        %851 = vmatpush2.bf16.xpose.msra.mxu0 0
        %852 = vmatprep.subr.bf16.mxu0 0
        %853 = vmatpush2.bf16.xpose.msra.mxu0 0
        %854 = vmatprep.subr.bf16.mxu0 0
        %855 = vmatpush2.bf16.xpose.msra.mxu0 0
        %856 = vmatprep.subr.bf16.mxu0 0
        %857 = vmatpush2.bf16.xpose.msra.mxu0 0
        %858 = vmatprep.subr.bf16.mxu0 0
        %859 = vmatpush2.bf16.xpose.msra.mxu0 0
        %860 = vmatprep.mubr.bf16.mxu0 0
        %861 = vmatmul.mubr.bf16.gmra.mxu0 %v817
        %v862 = vpop.f32.mrf.mxu0
        %v863 = vadd.f32 0.0, %v862
        %v864 = vpop.f32.mrf.mxu0
        %v865 = vpop.f32.mrf.mxu0
        %v866 = vadd.f32 0.0, %v865
        %v867 = vpop.f32.mrf.mxu0
        %868 = vmatprep.mubr.bf16.mxu0 0
        %869 = vmatmul.mubr.bf16.gmra.mxu0 %v820
        %v870 = vpop.f32.mrf.mxu0
        %v871 = vadd.f32 0.0, %v870
        %v872 = vpop.f32.mrf.mxu0
        %v873 = vpop.f32.mrf.mxu0
        %v874 = vadd.f32 0.0, %v873
        %v875 = vpop.f32.mrf.mxu0
        %876 = vdwg.mxu0
        %v877 = vsel %vm268, %v408, -inf
        %878 = vmax.xlane.f32.xlu0 %v877
        %v879 = vpop.xlane.xlu0 %878
        %v880 = vsel %vm268, %v411, -inf
        %881 = vmax.xlane.f32.xlu0 %v880
        %v882 = vpop.xlane.xlu0 %881
        %v883 = vsel %vm268, %v416, -inf
        %884 = vmax.xlane.f32.xlu0 %v883
        %v885 = vpop.xlane.xlu0 %884
        %v886 = vsel %vm268, %v419, -inf
        %887 = vmax.xlane.f32.xlu0 %v886
        %v888 = vpop.xlane.xlu0 %887
        %v889 = vsel %vm268, %v473, -inf
        %890 = vmax.xlane.f32.xlu0 %v889
        %v891 = vpop.xlane.xlu0 %890
        %v892 = vsel %vm268, %v476, -inf
        %893 = vmax.xlane.f32.xlu0 %v892
        %v894 = vpop.xlane.xlu0 %893
        %v895 = vsel %vm268, %v481, -inf
        %896 = vmax.xlane.f32.xlu0 %v895
        %v897 = vpop.xlane.xlu0 %896
        %v898 = vsel %vm268, %v484, -inf
        %899 = vmax.xlane.f32.xlu0 %v898
        %v900 = vpop.xlane.xlu0 %899
        %v901 = vsel %vm268, %v538, -inf
        %902 = vmax.xlane.f32.xlu0 %v901
        %v903 = vpop.xlane.xlu0 %902
        %v904 = vsel %vm268, %v541, -inf
        %905 = vmax.xlane.f32.xlu0 %v904
        %v906 = vpop.xlane.xlu0 %905
        %v907 = vsel %vm268, %v546, -inf
        %908 = vmax.xlane.f32.xlu0 %v907
        %v909 = vpop.xlane.xlu0 %908
        %v910 = vsel %vm268, %v549, -inf
        %911 = vmax.xlane.f32.xlu0 %v910
        %v912 = vpop.xlane.xlu0 %911
        %v913 = vsel %vm268, %v603, -inf
        %914 = vmax.xlane.f32.xlu0 %v913
        %v915 = vpop.xlane.xlu0 %914
        %v916 = vsel %vm268, %v606, -inf
        %917 = vmax.xlane.f32.xlu0 %v916
        %v918 = vpop.xlane.xlu0 %917
        %v919 = vsel %vm268, %v611, -inf
        %920 = vmax.xlane.f32.xlu0 %v919
        %v921 = vpop.xlane.xlu0 %920
        %v922 = vsel %vm268, %v614, -inf
        %923 = vmax.xlane.f32.xlu0 %v922
        %v924 = vpop.xlane.xlu0 %923
        %v925 = vsel %vm268, %v668, -inf
        %926 = vmax.xlane.f32.xlu0 %v925
        %v927 = vpop.xlane.xlu0 %926
        %v928 = vsel %vm268, %v671, -inf
        %929 = vmax.xlane.f32.xlu0 %v928
        %v930 = vpop.xlane.xlu0 %929
        %v931 = vsel %vm268, %v676, -inf
        %932 = vmax.xlane.f32.xlu0 %v931
        %v933 = vpop.xlane.xlu0 %932
        %v934 = vsel %vm268, %v679, -inf
        %935 = vmax.xlane.f32.xlu0 %v934
        %v936 = vpop.xlane.xlu0 %935
        %v937 = vsel %vm268, %v733, -inf
        %938 = vmax.xlane.f32.xlu0 %v937
        %v939 = vpop.xlane.xlu0 %938
        %v940 = vsel %vm268, %v736, -inf
        %941 = vmax.xlane.f32.xlu0 %v940
        %v942 = vpop.xlane.xlu0 %941
        %v943 = vsel %vm268, %v741, -inf
        %944 = vmax.xlane.f32.xlu0 %v943
        %v945 = vpop.xlane.xlu0 %944
        %v946 = vsel %vm268, %v744, -inf
        %947 = vmax.xlane.f32.xlu0 %v946
        %v948 = vpop.xlane.xlu0 %947
        %v949 = vsel %vm268, %v798, -inf
        %950 = vmax.xlane.f32.xlu0 %v949
        %v951 = vpop.xlane.xlu0 %950
        %v952 = vsel %vm268, %v801, -inf
        %953 = vmax.xlane.f32.xlu0 %v952
        %v954 = vpop.xlane.xlu0 %953
        %v955 = vsel %vm268, %v806, -inf
        %956 = vmax.xlane.f32.xlu0 %v955
        %v957 = vpop.xlane.xlu0 %956
        %v958 = vsel %vm268, %v809, -inf
        %959 = vmax.xlane.f32.xlu0 %v958
        %v960 = vpop.xlane.xlu0 %959
        %v961 = vsel %vm268, %v863, -inf
        %962 = vmax.xlane.f32.xlu0 %v961
        %v963 = vpop.xlane.xlu0 %962
        %v964 = vsel %vm268, %v866, -inf
        %965 = vmax.xlane.f32.xlu0 %v964
        %v966 = vpop.xlane.xlu0 %965
        %v967 = vsel %vm268, %v871, -inf
        %968 = vmax.xlane.f32.xlu0 %v967
        %v969 = vpop.xlane.xlu0 %968
        %v970 = vsel %vm268, %v874, -inf
        %971 = vmax.xlane.f32.xlu0 %v970
        %v972 = vpop.xlane.xlu0 %971
        %v973 = vsub.f32 %v408, %v879
        %v974 = vsub.f32 %v411, %v882
        %v975 = vsub.f32 %v416, %v885
        %v976 = vsub.f32 %v419, %v888
        %v977 = vsub.f32 %v473, %v891
        %v978 = vsub.f32 %v476, %v894
        %v979 = vsub.f32 %v481, %v897
        %v980 = vsub.f32 %v484, %v900
        %v981 = vsub.f32 %v538, %v903
        %v982 = vsub.f32 %v541, %v906
        %v983 = vsub.f32 %v546, %v909
        %v984 = vsub.f32 %v549, %v912
        %v985 = vsub.f32 %v603, %v915
        %v986 = vsub.f32 %v606, %v918
        %v987 = vsub.f32 %v611, %v921
        %v988 = vsub.f32 %v614, %v924
        %v989 = vsub.f32 %v668, %v927
        %v990 = vsub.f32 %v671, %v930
        %v991 = vsub.f32 %v676, %v933
        %v992 = vsub.f32 %v679, %v936
        %v993 = vsub.f32 %v733, %v939
        %v994 = vsub.f32 %v736, %v942
        %v995 = vsub.f32 %v741, %v945
        %v996 = vsub.f32 %v744, %v948
        %v997 = vsub.f32 %v798, %v951
        %v998 = vsub.f32 %v801, %v954
        %v999 = vsub.f32 %v806, %v957
        %v1000 = vsub.f32 %v809, %v960
        %v1001 = vsub.f32 %v863, %v963
        %v1002 = vsub.f32 %v866, %v966
        %v1003 = vsub.f32 %v871, %v969
        %v1004 = vsub.f32 %v874, %v972
        %v1005 = vmul.f32 %v973, 1.442695
        %v1006 = vpow.pop %v1005
        %v1007 = vmul.f32 %v974, 1.442695
        %v1008 = vpow.pop %v1007
        %v1009 = vmul.f32 %v975, 1.442695
        %v1010 = vpow.pop %v1009
        %v1011 = vmul.f32 %v976, 1.442695
        %v1012 = vpow.pop %v1011
        %v1013 = vmul.f32 %v977, 1.442695
        %v1014 = vpow.pop %v1013
        %v1015 = vmul.f32 %v978, 1.442695
        %v1016 = vpow.pop %v1015
        %v1017 = vmul.f32 %v979, 1.442695
        %v1018 = vpow.pop %v1017
        %v1019 = vmul.f32 %v980, 1.442695
        %v1020 = vpow.pop %v1019
        %v1021 = vmul.f32 %v981, 1.442695
        %v1022 = vpow.pop %v1021
        %v1023 = vmul.f32 %v982, 1.442695
        %v1024 = vpow.pop %v1023
        %v1025 = vmul.f32 %v983, 1.442695
        %v1026 = vpow.pop %v1025
        %v1027 = vmul.f32 %v984, 1.442695
        %v1028 = vpow.pop %v1027
        %v1029 = vmul.f32 %v985, 1.442695
        %v1030 = vpow.pop %v1029
        %v1031 = vmul.f32 %v986, 1.442695
        %v1032 = vpow.pop %v1031
        %v1033 = vmul.f32 %v987, 1.442695
        %v1034 = vpow.pop %v1033
        %v1035 = vmul.f32 %v988, 1.442695
        %v1036 = vpow.pop %v1035
        %v1037 = vmul.f32 %v989, 1.442695
        %v1038 = vpow.pop %v1037
        %v1039 = vmul.f32 %v990, 1.442695
        %v1040 = vpow.pop %v1039
        %v1041 = vmul.f32 %v991, 1.442695
        %v1042 = vpow.pop %v1041
        %v1043 = vmul.f32 %v992, 1.442695
        %v1044 = vpow.pop %v1043
        %v1045 = vmul.f32 %v993, 1.442695
        %v1046 = vpow.pop %v1045
        %v1047 = vmul.f32 %v994, 1.442695
        %v1048 = vpow.pop %v1047
        %v1049 = vmul.f32 %v995, 1.442695
        %v1050 = vpow.pop %v1049
        %v1051 = vmul.f32 %v996, 1.442695
        %v1052 = vpow.pop %v1051
        %v1053 = vmul.f32 %v997, 1.442695
        %v1054 = vpow.pop %v1053
        %v1055 = vmul.f32 %v998, 1.442695
        %v1056 = vpow.pop %v1055
        %v1057 = vmul.f32 %v999, 1.442695
        %v1058 = vpow.pop %v1057
        %v1059 = vmul.f32 %v1000, 1.442695
        %v1060 = vpow.pop %v1059
        %v1061 = vmul.f32 %v1001, 1.442695
        %v1062 = vpow.pop %v1061
        %v1063 = vmul.f32 %v1002, 1.442695
        %v1064 = vpow.pop %v1063
        %v1065 = vmul.f32 %v1003, 1.442695
        %v1066 = vpow.pop %v1065
        %v1067 = vmul.f32 %v1004, 1.442695
        %v1068 = vpow.pop %v1067
        %v1069 = vsel %vm268, %v1006, 0.0
        %1070 = vadd.xlane.f32.xlu0 %v1069
        %v1071 = vpop.xlane.xlu0 %1070
        %v1072 = vsel %vm268, %v1008, 0.0
        %1073 = vadd.xlane.f32.xlu0 %v1072
        %v1074 = vpop.xlane.xlu0 %1073
        %v1075 = vsel %vm268, %v1010, 0.0
        %1076 = vadd.xlane.f32.xlu0 %v1075
        %v1077 = vpop.xlane.xlu0 %1076
        %v1078 = vsel %vm268, %v1012, 0.0
        %1079 = vadd.xlane.f32.xlu0 %v1078
        %v1080 = vpop.xlane.xlu0 %1079
        %v1081 = vsel %vm268, %v1014, 0.0
        %1082 = vadd.xlane.f32.xlu0 %v1081
        %v1083 = vpop.xlane.xlu0 %1082
        %v1084 = vsel %vm268, %v1016, 0.0
        %1085 = vadd.xlane.f32.xlu0 %v1084
        %v1086 = vpop.xlane.xlu0 %1085
        %v1087 = vsel %vm268, %v1018, 0.0
        %1088 = vadd.xlane.f32.xlu0 %v1087
        %v1089 = vpop.xlane.xlu0 %1088
        %v1090 = vsel %vm268, %v1020, 0.0
        %1091 = vadd.xlane.f32.xlu0 %v1090
        %v1092 = vpop.xlane.xlu0 %1091
        %v1093 = vsel %vm268, %v1022, 0.0
        %1094 = vadd.xlane.f32.xlu0 %v1093
        %v1095 = vpop.xlane.xlu0 %1094
        %v1096 = vsel %vm268, %v1024, 0.0
        %1097 = vadd.xlane.f32.xlu0 %v1096
        %v1098 = vpop.xlane.xlu0 %1097
        %v1099 = vsel %vm268, %v1026, 0.0
        %1100 = vadd.xlane.f32.xlu0 %v1099
        %v1101 = vpop.xlane.xlu0 %1100
        %v1102 = vsel %vm268, %v1028, 0.0
        %1103 = vadd.xlane.f32.xlu0 %v1102
        %v1104 = vpop.xlane.xlu0 %1103
        %v1105 = vsel %vm268, %v1030, 0.0
        %1106 = vadd.xlane.f32.xlu0 %v1105
        %v1107 = vpop.xlane.xlu0 %1106
        %v1108 = vsel %vm268, %v1032, 0.0
        %1109 = vadd.xlane.f32.xlu0 %v1108
        %v1110 = vpop.xlane.xlu0 %1109
        %v1111 = vsel %vm268, %v1034, 0.0
        %1112 = vadd.xlane.f32.xlu0 %v1111
        %v1113 = vpop.xlane.xlu0 %1112
        %v1114 = vsel %vm268, %v1036, 0.0
        %1115 = vadd.xlane.f32.xlu0 %v1114
        %v1116 = vpop.xlane.xlu0 %1115
        %v1117 = vsel %vm268, %v1038, 0.0
        %1118 = vadd.xlane.f32.xlu0 %v1117
        %v1119 = vpop.xlane.xlu0 %1118
        %v1120 = vsel %vm268, %v1040, 0.0
        %1121 = vadd.xlane.f32.xlu0 %v1120
        %v1122 = vpop.xlane.xlu0 %1121
        %v1123 = vsel %vm268, %v1042, 0.0
        %1124 = vadd.xlane.f32.xlu0 %v1123
        %v1125 = vpop.xlane.xlu0 %1124
        %v1126 = vsel %vm268, %v1044, 0.0
        %1127 = vadd.xlane.f32.xlu0 %v1126
        %v1128 = vpop.xlane.xlu0 %1127
        %v1129 = vsel %vm268, %v1046, 0.0
        %1130 = vadd.xlane.f32.xlu0 %v1129
        %v1131 = vpop.xlane.xlu0 %1130
        %v1132 = vsel %vm268, %v1048, 0.0
        %1133 = vadd.xlane.f32.xlu0 %v1132
        %v1134 = vpop.xlane.xlu0 %1133
        %v1135 = vsel %vm268, %v1050, 0.0
        %1136 = vadd.xlane.f32.xlu0 %v1135
        %v1137 = vpop.xlane.xlu0 %1136
        %v1138 = vsel %vm268, %v1052, 0.0
        %1139 = vadd.xlane.f32.xlu0 %v1138
        %v1140 = vpop.xlane.xlu0 %1139
        %v1141 = vsel %vm268, %v1054, 0.0
        %1142 = vadd.xlane.f32.xlu0 %v1141
        %v1143 = vpop.xlane.xlu0 %1142
        %v1144 = vsel %vm268, %v1056, 0.0
        %1145 = vadd.xlane.f32.xlu0 %v1144
        %v1146 = vpop.xlane.xlu0 %1145
        %v1147 = vsel %vm268, %v1058, 0.0
        %1148 = vadd.xlane.f32.xlu0 %v1147
        %v1149 = vpop.xlane.xlu0 %1148
        %v1150 = vsel %vm268, %v1060, 0.0
        %1151 = vadd.xlane.f32.xlu0 %v1150
        %v1152 = vpop.xlane.xlu0 %1151
        %v1153 = vsel %vm268, %v1062, 0.0
        %1154 = vadd.xlane.f32.xlu0 %v1153
        %v1155 = vpop.xlane.xlu0 %1154
        %v1156 = vsel %vm268, %v1064, 0.0
        %1157 = vadd.xlane.f32.xlu0 %v1156
        %v1158 = vpop.xlane.xlu0 %1157
        %v1159 = vsel %vm268, %v1066, 0.0
        %1160 = vadd.xlane.f32.xlu0 %v1159
        %v1161 = vpop.xlane.xlu0 %1160
        %v1162 = vsel %vm268, %v1068, 0.0
        %1163 = vadd.xlane.f32.xlu0 %v1162
        %v1164 = vpop.xlane.xlu0 %1163
        %v1165 = vrcp.pop %v1071
        %v1166 = vrcp.pop %v1074
        %v1167 = vrcp.pop %v1077
        %v1168 = vrcp.pop %v1080
        %v1169 = vrcp.pop %v1083
        %v1170 = vrcp.pop %v1086
        %v1171 = vrcp.pop %v1089
        %v1172 = vrcp.pop %v1092
        %v1173 = vrcp.pop %v1095
        %v1174 = vrcp.pop %v1098
        %v1175 = vrcp.pop %v1101
        %v1176 = vrcp.pop %v1104
        %v1177 = vrcp.pop %v1107
        %v1178 = vrcp.pop %v1110
        %v1179 = vrcp.pop %v1113
        %v1180 = vrcp.pop %v1116
        %v1181 = vrcp.pop %v1119
        %v1182 = vrcp.pop %v1122
        %v1183 = vrcp.pop %v1125
        %v1184 = vrcp.pop %v1128
        %v1185 = vrcp.pop %v1131
        %v1186 = vrcp.pop %v1134
        %v1187 = vrcp.pop %v1137
        %v1188 = vrcp.pop %v1140
        %v1189 = vrcp.pop %v1143
        %v1190 = vrcp.pop %v1146
        %v1191 = vrcp.pop %v1149
        %v1192 = vrcp.pop %v1152
        %v1193 = vrcp.pop %v1155
        %v1194 = vrcp.pop %v1158
        %v1195 = vrcp.pop %v1161
        %v1196 = vrcp.pop %v1164
        %v1197 = vmul.f32 %v1006, %v1165
        %v1198 = vmul.f32 %v1008, %v1166
        %v1199 = vmul.f32 %v1010, %v1167
        %v1200 = vmul.f32 %v1012, %v1168
        %v1201 = vmul.f32 %v1014, %v1169
        %v1202 = vmul.f32 %v1016, %v1170
        %v1203 = vmul.f32 %v1018, %v1171
        %v1204 = vmul.f32 %v1020, %v1172
        %v1205 = vmul.f32 %v1022, %v1173
        %v1206 = vmul.f32 %v1024, %v1174
        %v1207 = vmul.f32 %v1026, %v1175
        %v1208 = vmul.f32 %v1028, %v1176
        %v1209 = vmul.f32 %v1030, %v1177
        %v1210 = vmul.f32 %v1032, %v1178
        %v1211 = vmul.f32 %v1034, %v1179
        %v1212 = vmul.f32 %v1036, %v1180
        %v1213 = vmul.f32 %v1038, %v1181
        %v1214 = vmul.f32 %v1040, %v1182
        %v1215 = vmul.f32 %v1042, %v1183
        %v1216 = vmul.f32 %v1044, %v1184
        %v1217 = vmul.f32 %v1046, %v1185
        %v1218 = vmul.f32 %v1048, %v1186
        %v1219 = vmul.f32 %v1050, %v1187
        %v1220 = vmul.f32 %v1052, %v1188
        %v1221 = vmul.f32 %v1054, %v1189
        %v1222 = vmul.f32 %v1056, %v1190
        %v1223 = vmul.f32 %v1058, %v1191
        %v1224 = vmul.f32 %v1060, %v1192
        %v1225 = vmul.f32 %v1062, %v1193
        %v1226 = vmul.f32 %v1064, %v1194
        %v1227 = vmul.f32 %v1066, %v1195
        %v1228 = vmul.f32 %v1068, %v1196
        %v1229 = vpack.c.bf16 %v1198, %v1197
        %v1230 = vpack.c.bf16 %v1200, %v1199
        %v1231 = vpack.c.bf16 %v1202, %v1201
        %v1232 = vpack.c.bf16 %v1204, %v1203
        %v1233 = vpack.c.bf16 %v1206, %v1205
        %v1234 = vpack.c.bf16 %v1208, %v1207
        %v1235 = vpack.c.bf16 %v1210, %v1209
        %v1236 = vpack.c.bf16 %v1212, %v1211
        %v1237 = vpack.c.bf16 %v1214, %v1213
        %v1238 = vpack.c.bf16 %v1216, %v1215
        %v1239 = vpack.c.bf16 %v1218, %v1217
        %v1240 = vpack.c.bf16 %v1220, %v1219
        %v1241 = vpack.c.bf16 %v1222, %v1221
        %v1242 = vpack.c.bf16 %v1224, %v1223
        %v1243 = vpack.c.bf16 %v1226, %v1225
        %v1244 = vpack.c.bf16 %v1228, %v1227
        %1245 = vrot.lane.b32.xlu0 %v324, 64
        %v1246 = vpop.permute.xlu0 %1245
        %1247 = vrot.lane.b32.xlu0 %v325, 64
        %v1248 = vpop.permute.xlu0 %1247
        %v1252 = vsel %vm268, %v1229, 0
        %v1255 = vsel %vm268, %v1230, 0
        %1257 = vmatprep.subr.bf16.mxu0 0
        %1258 = vmatpush1.bf16.msra.mxu0 0
        %1259 = vmatprep.subr.bf16.mxu0 0
        %1260 = vmatpush1.bf16.msra.mxu0 0
        %1261 = vmatprep.subr.bf16.mxu0 0
        %1262 = vmatpush1.bf16.msra.mxu0 0
        %1263 = vmatprep.subr.bf16.mxu0 0
        %1264 = vmatpush1.bf16.msra.mxu0 0
        %1265 = vmatprep.subr.bf16.mxu0 0
        %1266 = vmatpush1.bf16.msra.mxu0 0
        %1267 = vmatprep.subr.bf16.mxu0 0
        %1268 = vmatpush1.bf16.msra.mxu0 0
        %1269 = vmatprep.subr.bf16.mxu0 0
        %1270 = vmatpush1.bf16.msra.mxu0 %v1248
        %1271 = vmatprep.subr.bf16.mxu0 0
        %1272 = vmatpush1.bf16.msra.mxu0 %v1246
        %1273 = vmatprep.subr.bf16.mxu0 0
        %1274 = vmatpush2.bf16.msra.mxu0 0
        %1275 = vmatprep.subr.bf16.mxu0 0
        %1276 = vmatpush2.bf16.msra.mxu0 0
        %1277 = vmatprep.subr.bf16.mxu0 0
        %1278 = vmatpush2.bf16.msra.mxu0 0
        %1279 = vmatprep.subr.bf16.mxu0 0
        %1280 = vmatpush2.bf16.msra.mxu0 0
        %1281 = vmatprep.subr.bf16.mxu0 0
        %1282 = vmatpush2.bf16.msra.mxu0 0
        %1283 = vmatprep.subr.bf16.mxu0 0
        %1284 = vmatpush2.bf16.msra.mxu0 0
        %1285 = vmatprep.subr.bf16.mxu0 0
        %1286 = vmatpush2.bf16.msra.mxu0 0
        %1287 = vmatprep.subr.bf16.mxu0 0
        %1288 = vmatpush2.bf16.msra.mxu0 0
        %1289 = vmatprep.mubr.bf16.mxu0 0
        %1290 = vmatmul.mubr.bf16.gmra.mxu0 %v1252
        %v1291 = vpop.f32.mrf.mxu0
        %v1292 = vadd.f32 0.0, %v1291
        %v1293 = vpop.f32.mrf.mxu0
        %v1294 = vpop.f32.mrf.mxu0
        %v1295 = vadd.f32 0.0, %v1294
        %v1296 = vpop.f32.mrf.mxu0
        %1297 = vmatprep.mubr.bf16.mxu0 0
        %1298 = vmatmul.mubr.bf16.gmra.mxu0 %v1255
        %v1299 = vpop.f32.mrf.mxu0
        %v1300 = vadd.f32 0.0, %v1299
        %v1301 = vpop.f32.mrf.mxu0
        %v1302 = vpop.f32.mrf.mxu0
        %v1303 = vadd.f32 0.0, %v1302
        %v1304 = vpop.f32.mrf.mxu0
        %1305 = vdwg.mxu0
        %1306 = vrot.lane.b32.xlu0 %v329, 64
        %v1307 = vpop.permute.xlu0 %1306
        %1308 = vrot.lane.b32.xlu0 %v331, 64
        %v1309 = vpop.permute.xlu0 %1308
        %v1313 = vsel %vm268, %v1231, 0
        %v1316 = vsel %vm268, %v1232, 0
        %1318 = vmatprep.subr.bf16.mxu0 0
        %1319 = vmatpush1.bf16.msra.mxu0 0
        %1320 = vmatprep.subr.bf16.mxu0 0
        %1321 = vmatpush1.bf16.msra.mxu0 0
        %1322 = vmatprep.subr.bf16.mxu0 0
        %1323 = vmatpush1.bf16.msra.mxu0 0
        %1324 = vmatprep.subr.bf16.mxu0 0
        %1325 = vmatpush1.bf16.msra.mxu0 0
        %1326 = vmatprep.subr.bf16.mxu0 0
        %1327 = vmatpush1.bf16.msra.mxu0 0
        %1328 = vmatprep.subr.bf16.mxu0 0
        %1329 = vmatpush1.bf16.msra.mxu0 0
        %1330 = vmatprep.subr.bf16.mxu0 0
        %1331 = vmatpush1.bf16.msra.mxu0 %v1309
        %1332 = vmatprep.subr.bf16.mxu0 0
        %1333 = vmatpush1.bf16.msra.mxu0 %v1307
        %1334 = vmatprep.subr.bf16.mxu0 0
        %1335 = vmatpush2.bf16.msra.mxu0 0
        %1336 = vmatprep.subr.bf16.mxu0 0
        %1337 = vmatpush2.bf16.msra.mxu0 0
        %1338 = vmatprep.subr.bf16.mxu0 0
        %1339 = vmatpush2.bf16.msra.mxu0 0
        %1340 = vmatprep.subr.bf16.mxu0 0
        %1341 = vmatpush2.bf16.msra.mxu0 0
        %1342 = vmatprep.subr.bf16.mxu0 0
        %1343 = vmatpush2.bf16.msra.mxu0 0
        %1344 = vmatprep.subr.bf16.mxu0 0
        %1345 = vmatpush2.bf16.msra.mxu0 0
        %1346 = vmatprep.subr.bf16.mxu0 0
        %1347 = vmatpush2.bf16.msra.mxu0 0
        %1348 = vmatprep.subr.bf16.mxu0 0
        %1349 = vmatpush2.bf16.msra.mxu0 0
        %1350 = vmatprep.mubr.bf16.mxu0 0
        %1351 = vmatmul.mubr.bf16.gmra.mxu0 %v1313
        %v1352 = vpop.f32.mrf.mxu0
        %v1353 = vadd.f32 0.0, %v1352
        %v1354 = vpop.f32.mrf.mxu0
        %v1355 = vpop.f32.mrf.mxu0
        %v1356 = vadd.f32 0.0, %v1355
        %v1357 = vpop.f32.mrf.mxu0
        %1358 = vmatprep.mubr.bf16.mxu0 0
        %1359 = vmatmul.mubr.bf16.gmra.mxu0 %v1316
        %v1360 = vpop.f32.mrf.mxu0
        %v1361 = vadd.f32 0.0, %v1360
        %v1362 = vpop.f32.mrf.mxu0
        %v1363 = vpop.f32.mrf.mxu0
        %v1364 = vadd.f32 0.0, %v1363
        %v1365 = vpop.f32.mrf.mxu0
        %1366 = vdwg.mxu0
        %1367 = vrot.lane.b32.xlu0 %v333, 64
        %v1368 = vpop.permute.xlu0 %1367
        %1369 = vrot.lane.b32.xlu0 %v335, 64
        %v1370 = vpop.permute.xlu0 %1369
        %v1374 = vsel %vm268, %v1233, 0
        %v1377 = vsel %vm268, %v1234, 0
        %1379 = vmatprep.subr.bf16.mxu0 0
        %1380 = vmatpush1.bf16.msra.mxu0 0
        %1381 = vmatprep.subr.bf16.mxu0 0
        %1382 = vmatpush1.bf16.msra.mxu0 0
        %1383 = vmatprep.subr.bf16.mxu0 0
        %1384 = vmatpush1.bf16.msra.mxu0 0
        %1385 = vmatprep.subr.bf16.mxu0 0
        %1386 = vmatpush1.bf16.msra.mxu0 0
        %1387 = vmatprep.subr.bf16.mxu0 0
        %1388 = vmatpush1.bf16.msra.mxu0 0
        %1389 = vmatprep.subr.bf16.mxu0 0
        %1390 = vmatpush1.bf16.msra.mxu0 0
        %1391 = vmatprep.subr.bf16.mxu0 0
        %1392 = vmatpush1.bf16.msra.mxu0 %v1370
        %1393 = vmatprep.subr.bf16.mxu0 0
        %1394 = vmatpush1.bf16.msra.mxu0 %v1368
        %1395 = vmatprep.subr.bf16.mxu0 0
        %1396 = vmatpush2.bf16.msra.mxu0 0
        %1397 = vmatprep.subr.bf16.mxu0 0
        %1398 = vmatpush2.bf16.msra.mxu0 0
        %1399 = vmatprep.subr.bf16.mxu0 0
        %1400 = vmatpush2.bf16.msra.mxu0 0
        %1401 = vmatprep.subr.bf16.mxu0 0
        %1402 = vmatpush2.bf16.msra.mxu0 0
        %1403 = vmatprep.subr.bf16.mxu0 0
        %1404 = vmatpush2.bf16.msra.mxu0 0
        %1405 = vmatprep.subr.bf16.mxu0 0
        %1406 = vmatpush2.bf16.msra.mxu0 0
        %1407 = vmatprep.subr.bf16.mxu0 0
        %1408 = vmatpush2.bf16.msra.mxu0 0
        %1409 = vmatprep.subr.bf16.mxu0 0
        %1410 = vmatpush2.bf16.msra.mxu0 0
        %1411 = vmatprep.mubr.bf16.mxu0 0
        %1412 = vmatmul.mubr.bf16.gmra.mxu0 %v1374
        %v1413 = vpop.f32.mrf.mxu0
        %v1414 = vadd.f32 0.0, %v1413
        %v1415 = vpop.f32.mrf.mxu0
        %v1416 = vpop.f32.mrf.mxu0
        %v1417 = vadd.f32 0.0, %v1416
        %v1418 = vpop.f32.mrf.mxu0
        %1419 = vmatprep.mubr.bf16.mxu0 0
        %1420 = vmatmul.mubr.bf16.gmra.mxu0 %v1377
        %v1421 = vpop.f32.mrf.mxu0
        %v1422 = vadd.f32 0.0, %v1421
        %v1423 = vpop.f32.mrf.mxu0
        %v1424 = vpop.f32.mrf.mxu0
        %v1425 = vadd.f32 0.0, %v1424
        %v1426 = vpop.f32.mrf.mxu0
        %1427 = vdwg.mxu0
        %1428 = vrot.lane.b32.xlu0 %v337, 64
        %v1429 = vpop.permute.xlu0 %1428
        %1430 = vrot.lane.b32.xlu0 %v339, 64
        %v1431 = vpop.permute.xlu0 %1430
        %v1435 = vsel %vm268, %v1235, 0
        %v1438 = vsel %vm268, %v1236, 0
        %1440 = vmatprep.subr.bf16.mxu0 0
        %1441 = vmatpush1.bf16.msra.mxu0 0
        %1442 = vmatprep.subr.bf16.mxu0 0
        %1443 = vmatpush1.bf16.msra.mxu0 0
        %1444 = vmatprep.subr.bf16.mxu0 0
        %1445 = vmatpush1.bf16.msra.mxu0 0
        %1446 = vmatprep.subr.bf16.mxu0 0
        %1447 = vmatpush1.bf16.msra.mxu0 0
        %1448 = vmatprep.subr.bf16.mxu0 0
        %1449 = vmatpush1.bf16.msra.mxu0 0
        %1450 = vmatprep.subr.bf16.mxu0 0
        %1451 = vmatpush1.bf16.msra.mxu0 0
        %1452 = vmatprep.subr.bf16.mxu0 0
        %1453 = vmatpush1.bf16.msra.mxu0 %v1431
        %1454 = vmatprep.subr.bf16.mxu0 0
        %1455 = vmatpush1.bf16.msra.mxu0 %v1429
        %1456 = vmatprep.subr.bf16.mxu0 0
        %1457 = vmatpush2.bf16.msra.mxu0 0
        %1458 = vmatprep.subr.bf16.mxu0 0
        %1459 = vmatpush2.bf16.msra.mxu0 0
        %1460 = vmatprep.subr.bf16.mxu0 0
        %1461 = vmatpush2.bf16.msra.mxu0 0
        %1462 = vmatprep.subr.bf16.mxu0 0
        %1463 = vmatpush2.bf16.msra.mxu0 0
        %1464 = vmatprep.subr.bf16.mxu0 0
        %1465 = vmatpush2.bf16.msra.mxu0 0
        %1466 = vmatprep.subr.bf16.mxu0 0
        %1467 = vmatpush2.bf16.msra.mxu0 0
        %1468 = vmatprep.subr.bf16.mxu0 0
        %1469 = vmatpush2.bf16.msra.mxu0 0
        %1470 = vmatprep.subr.bf16.mxu0 0
        %1471 = vmatpush2.bf16.msra.mxu0 0
        %1472 = vmatprep.mubr.bf16.mxu0 0
        %1473 = vmatmul.mubr.bf16.gmra.mxu0 %v1435
        %v1474 = vpop.f32.mrf.mxu0
        %v1475 = vadd.f32 0.0, %v1474
        %v1476 = vpop.f32.mrf.mxu0
        %v1477 = vpop.f32.mrf.mxu0
        %v1478 = vadd.f32 0.0, %v1477
        %v1479 = vpop.f32.mrf.mxu0
        %1480 = vmatprep.mubr.bf16.mxu0 0
        %1481 = vmatmul.mubr.bf16.gmra.mxu0 %v1438
        %v1482 = vpop.f32.mrf.mxu0
        %v1483 = vadd.f32 0.0, %v1482
        %v1484 = vpop.f32.mrf.mxu0
        %v1485 = vpop.f32.mrf.mxu0
        %v1486 = vadd.f32 0.0, %v1485
        %v1487 = vpop.f32.mrf.mxu0
        %1488 = vdwg.mxu0
        %1489 = vrot.lane.b32.xlu0 %v341, 64
        %v1490 = vpop.permute.xlu0 %1489
        %1491 = vrot.lane.b32.xlu0 %v343, 64
        %v1492 = vpop.permute.xlu0 %1491
        %v1496 = vsel %vm268, %v1237, 0
        %v1499 = vsel %vm268, %v1238, 0
        %1501 = vmatprep.subr.bf16.mxu0 0
        %1502 = vmatpush1.bf16.msra.mxu0 0
        %1503 = vmatprep.subr.bf16.mxu0 0
        %1504 = vmatpush1.bf16.msra.mxu0 0
        %1505 = vmatprep.subr.bf16.mxu0 0
        %1506 = vmatpush1.bf16.msra.mxu0 0
        %1507 = vmatprep.subr.bf16.mxu0 0
        %1508 = vmatpush1.bf16.msra.mxu0 0
        %1509 = vmatprep.subr.bf16.mxu0 0
        %1510 = vmatpush1.bf16.msra.mxu0 0
        %1511 = vmatprep.subr.bf16.mxu0 0
        %1512 = vmatpush1.bf16.msra.mxu0 0
        %1513 = vmatprep.subr.bf16.mxu0 0
        %1514 = vmatpush1.bf16.msra.mxu0 %v1492
        %1515 = vmatprep.subr.bf16.mxu0 0
        %1516 = vmatpush1.bf16.msra.mxu0 %v1490
        %1517 = vmatprep.subr.bf16.mxu0 0
        %1518 = vmatpush2.bf16.msra.mxu0 0
        %1519 = vmatprep.subr.bf16.mxu0 0
        %1520 = vmatpush2.bf16.msra.mxu0 0
        %1521 = vmatprep.subr.bf16.mxu0 0
        %1522 = vmatpush2.bf16.msra.mxu0 0
        %1523 = vmatprep.subr.bf16.mxu0 0
        %1524 = vmatpush2.bf16.msra.mxu0 0
        %1525 = vmatprep.subr.bf16.mxu0 0
        %1526 = vmatpush2.bf16.msra.mxu0 0
        %1527 = vmatprep.subr.bf16.mxu0 0
        %1528 = vmatpush2.bf16.msra.mxu0 0
        %1529 = vmatprep.subr.bf16.mxu0 0
        %1530 = vmatpush2.bf16.msra.mxu0 0
        %1531 = vmatprep.subr.bf16.mxu0 0
        %1532 = vmatpush2.bf16.msra.mxu0 0
        %1533 = vmatprep.mubr.bf16.mxu0 0
        %1534 = vmatmul.mubr.bf16.gmra.mxu0 %v1496
        %v1535 = vpop.f32.mrf.mxu0
        %v1536 = vadd.f32 0.0, %v1535
        %v1537 = vpop.f32.mrf.mxu0
        %v1538 = vpop.f32.mrf.mxu0
        %v1539 = vadd.f32 0.0, %v1538
        %v1540 = vpop.f32.mrf.mxu0
        %1541 = vmatprep.mubr.bf16.mxu0 0
        %1542 = vmatmul.mubr.bf16.gmra.mxu0 %v1499
        %v1543 = vpop.f32.mrf.mxu0
        %v1544 = vadd.f32 0.0, %v1543
        %v1545 = vpop.f32.mrf.mxu0
        %v1546 = vpop.f32.mrf.mxu0
        %v1547 = vadd.f32 0.0, %v1546
        %v1548 = vpop.f32.mrf.mxu0
        %1549 = vdwg.mxu0
        %1550 = vrot.lane.b32.xlu0 %v345, 64
        %v1551 = vpop.permute.xlu0 %1550
        %1552 = vrot.lane.b32.xlu0 %v347, 64
        %v1553 = vpop.permute.xlu0 %1552
        %v1557 = vsel %vm268, %v1239, 0
        %v1560 = vsel %vm268, %v1240, 0
        %1562 = vmatprep.subr.bf16.mxu0 0
        %1563 = vmatpush1.bf16.msra.mxu0 0
        %1564 = vmatprep.subr.bf16.mxu0 0
        %1565 = vmatpush1.bf16.msra.mxu0 0
        %1566 = vmatprep.subr.bf16.mxu0 0
        %1567 = vmatpush1.bf16.msra.mxu0 0
        %1568 = vmatprep.subr.bf16.mxu0 0
        %1569 = vmatpush1.bf16.msra.mxu0 0
        %1570 = vmatprep.subr.bf16.mxu0 0
        %1571 = vmatpush1.bf16.msra.mxu0 0
        %1572 = vmatprep.subr.bf16.mxu0 0
        %1573 = vmatpush1.bf16.msra.mxu0 0
        %1574 = vmatprep.subr.bf16.mxu0 0
        %1575 = vmatpush1.bf16.msra.mxu0 %v1553
        %1576 = vmatprep.subr.bf16.mxu0 0
        %1577 = vmatpush1.bf16.msra.mxu0 %v1551
        %1578 = vmatprep.subr.bf16.mxu0 0
        %1579 = vmatpush2.bf16.msra.mxu0 0
        %1580 = vmatprep.subr.bf16.mxu0 0
        %1581 = vmatpush2.bf16.msra.mxu0 0
        %1582 = vmatprep.subr.bf16.mxu0 0
        %1583 = vmatpush2.bf16.msra.mxu0 0
        %1584 = vmatprep.subr.bf16.mxu0 0
        %1585 = vmatpush2.bf16.msra.mxu0 0
        %1586 = vmatprep.subr.bf16.mxu0 0
        %1587 = vmatpush2.bf16.msra.mxu0 0
        %1588 = vmatprep.subr.bf16.mxu0 0
        %1589 = vmatpush2.bf16.msra.mxu0 0
        %1590 = vmatprep.subr.bf16.mxu0 0
        %1591 = vmatpush2.bf16.msra.mxu0 0
        %1592 = vmatprep.subr.bf16.mxu0 0
        %1593 = vmatpush2.bf16.msra.mxu0 0
        %1594 = vmatprep.mubr.bf16.mxu0 0
        %1595 = vmatmul.mubr.bf16.gmra.mxu0 %v1557
        %v1596 = vpop.f32.mrf.mxu0
        %v1597 = vadd.f32 0.0, %v1596
        %v1598 = vpop.f32.mrf.mxu0
        %v1599 = vpop.f32.mrf.mxu0
        %v1600 = vadd.f32 0.0, %v1599
        %v1601 = vpop.f32.mrf.mxu0
        %1602 = vmatprep.mubr.bf16.mxu0 0
        %1603 = vmatmul.mubr.bf16.gmra.mxu0 %v1560
        %v1604 = vpop.f32.mrf.mxu0
        %v1605 = vadd.f32 0.0, %v1604
        %v1606 = vpop.f32.mrf.mxu0
        %v1607 = vpop.f32.mrf.mxu0
        %v1608 = vadd.f32 0.0, %v1607
        %v1609 = vpop.f32.mrf.mxu0
        %1610 = vdwg.mxu0
        %1611 = vrot.lane.b32.xlu0 %v349, 64
        %v1612 = vpop.permute.xlu0 %1611
        %1613 = vrot.lane.b32.xlu0 %v351, 64
        %v1614 = vpop.permute.xlu0 %1613
        %v1618 = vsel %vm268, %v1241, 0
        %v1621 = vsel %vm268, %v1242, 0
        %1623 = vmatprep.subr.bf16.mxu0 0
        %1624 = vmatpush1.bf16.msra.mxu0 0
        %1625 = vmatprep.subr.bf16.mxu0 0
        %1626 = vmatpush1.bf16.msra.mxu0 0
        %1627 = vmatprep.subr.bf16.mxu0 0
        %1628 = vmatpush1.bf16.msra.mxu0 0
        %1629 = vmatprep.subr.bf16.mxu0 0
        %1630 = vmatpush1.bf16.msra.mxu0 0
        %1631 = vmatprep.subr.bf16.mxu0 0
        %1632 = vmatpush1.bf16.msra.mxu0 0
        %1633 = vmatprep.subr.bf16.mxu0 0
        %1634 = vmatpush1.bf16.msra.mxu0 0
        %1635 = vmatprep.subr.bf16.mxu0 0
        %1636 = vmatpush1.bf16.msra.mxu0 %v1614
        %1637 = vmatprep.subr.bf16.mxu0 0
        %1638 = vmatpush1.bf16.msra.mxu0 %v1612
        %1639 = vmatprep.subr.bf16.mxu0 0
        %1640 = vmatpush2.bf16.msra.mxu0 0
        %1641 = vmatprep.subr.bf16.mxu0 0
        %1642 = vmatpush2.bf16.msra.mxu0 0
        %1643 = vmatprep.subr.bf16.mxu0 0
        %1644 = vmatpush2.bf16.msra.mxu0 0
        %1645 = vmatprep.subr.bf16.mxu0 0
        %1646 = vmatpush2.bf16.msra.mxu0 0
        %1647 = vmatprep.subr.bf16.mxu0 0
        %1648 = vmatpush2.bf16.msra.mxu0 0
        %1649 = vmatprep.subr.bf16.mxu0 0
        %1650 = vmatpush2.bf16.msra.mxu0 0
        %1651 = vmatprep.subr.bf16.mxu0 0
        %1652 = vmatpush2.bf16.msra.mxu0 0
        %1653 = vmatprep.subr.bf16.mxu0 0
        %1654 = vmatpush2.bf16.msra.mxu0 0
        %1655 = vmatprep.mubr.bf16.mxu0 0
        %1656 = vmatmul.mubr.bf16.gmra.mxu0 %v1618
        %v1657 = vpop.f32.mrf.mxu0
        %v1658 = vadd.f32 0.0, %v1657
        %v1659 = vpop.f32.mrf.mxu0
        %v1660 = vpop.f32.mrf.mxu0
        %v1661 = vadd.f32 0.0, %v1660
        %v1662 = vpop.f32.mrf.mxu0
        %1663 = vmatprep.mubr.bf16.mxu0 0
        %1664 = vmatmul.mubr.bf16.gmra.mxu0 %v1621
        %v1665 = vpop.f32.mrf.mxu0
        %v1666 = vadd.f32 0.0, %v1665
        %v1667 = vpop.f32.mrf.mxu0
        %v1668 = vpop.f32.mrf.mxu0
        %v1669 = vadd.f32 0.0, %v1668
        %v1670 = vpop.f32.mrf.mxu0
        %1671 = vdwg.mxu0
        %1672 = vrot.lane.b32.xlu0 %v353, 64
        %v1673 = vpop.permute.xlu0 %1672
        %1674 = vrot.lane.b32.xlu0 %v355, 64
        %v1675 = vpop.permute.xlu0 %1674
        %v1679 = vsel %vm268, %v1243, 0
        %v1682 = vsel %vm268, %v1244, 0
        %1684 = vmatprep.subr.bf16.mxu0 0
        %1685 = vmatpush1.bf16.msra.mxu0 0
        %1686 = vmatprep.subr.bf16.mxu0 0
        %1687 = vmatpush1.bf16.msra.mxu0 0
        %1688 = vmatprep.subr.bf16.mxu0 0
        %1689 = vmatpush1.bf16.msra.mxu0 0
        %1690 = vmatprep.subr.bf16.mxu0 0
        %1691 = vmatpush1.bf16.msra.mxu0 0
        %1692 = vmatprep.subr.bf16.mxu0 0
        %1693 = vmatpush1.bf16.msra.mxu0 0
        %1694 = vmatprep.subr.bf16.mxu0 0
        %1695 = vmatpush1.bf16.msra.mxu0 0
        %1696 = vmatprep.subr.bf16.mxu0 0
        %1697 = vmatpush1.bf16.msra.mxu0 %v1675
        %1698 = vmatprep.subr.bf16.mxu0 0
        %1699 = vmatpush1.bf16.msra.mxu0 %v1673
        %1700 = vmatprep.subr.bf16.mxu0 0
        %1701 = vmatpush2.bf16.msra.mxu0 0
        %1702 = vmatprep.subr.bf16.mxu0 0
        %1703 = vmatpush2.bf16.msra.mxu0 0
        %1704 = vmatprep.subr.bf16.mxu0 0
        %1705 = vmatpush2.bf16.msra.mxu0 0
        %1706 = vmatprep.subr.bf16.mxu0 0
        %1707 = vmatpush2.bf16.msra.mxu0 0
        %1708 = vmatprep.subr.bf16.mxu0 0
        %1709 = vmatpush2.bf16.msra.mxu0 0
        %1710 = vmatprep.subr.bf16.mxu0 0
        %1711 = vmatpush2.bf16.msra.mxu0 0
        %1712 = vmatprep.subr.bf16.mxu0 0
        %1713 = vmatpush2.bf16.msra.mxu0 0
        %1714 = vmatprep.subr.bf16.mxu0 0
        %1715 = vmatpush2.bf16.msra.mxu0 0
        %1716 = vmatprep.mubr.bf16.mxu0 0
        %1717 = vmatmul.mubr.bf16.gmra.mxu0 %v1679
        %v1718 = vpop.f32.mrf.mxu0
        %v1719 = vadd.f32 0.0, %v1718
        %v1720 = vpop.f32.mrf.mxu0
        %v1721 = vpop.f32.mrf.mxu0
        %v1722 = vadd.f32 0.0, %v1721
        %v1723 = vpop.f32.mrf.mxu0
        %1724 = vmatprep.mubr.bf16.mxu0 0
        %1725 = vmatmul.mubr.bf16.gmra.mxu0 %v1682
        %v1726 = vpop.f32.mrf.mxu0
        %v1727 = vadd.f32 0.0, %v1726
        %v1728 = vpop.f32.mrf.mxu0
        %v1729 = vpop.f32.mrf.mxu0
        %v1730 = vadd.f32 0.0, %v1729
        %v1731 = vpop.f32.mrf.mxu0
        %1732 = vdwg.mxu0
        %1737 = vrot.lane.b32.xlu0 %v1353, 4
        %v1738 = vpop.permute.xlu0 %1737
        %1739 = vrot.lane.b32.xlu0 %v1356, 4
        %v1740 = vpop.permute.xlu0 %1739
        %1741 = vrot.lane.b32.xlu0 %v1361, 4
        %v1742 = vpop.permute.xlu0 %1741
        %1743 = vrot.lane.b32.xlu0 %v1364, 4
        %v1744 = vpop.permute.xlu0 %1743
        %1753 = vrot.lane.b32.xlu0 %v1414, 8
        %v1754 = vpop.permute.xlu0 %1753
        %1755 = vrot.lane.b32.xlu0 %v1417, 8
        %v1756 = vpop.permute.xlu0 %1755
        %1757 = vrot.lane.b32.xlu0 %v1422, 8
        %v1758 = vpop.permute.xlu0 %1757
        %1759 = vrot.lane.b32.xlu0 %v1425, 8
        %v1760 = vpop.permute.xlu0 %1759
        %1769 = vrot.lane.b32.xlu0 %v1475, 12
        %v1770 = vpop.permute.xlu0 %1769
        %1771 = vrot.lane.b32.xlu0 %v1478, 12
        %v1772 = vpop.permute.xlu0 %1771
        %1773 = vrot.lane.b32.xlu0 %v1483, 12
        %v1774 = vpop.permute.xlu0 %1773
        %1775 = vrot.lane.b32.xlu0 %v1486, 12
        %v1776 = vpop.permute.xlu0 %1775
        %1785 = vrot.lane.b32.xlu0 %v1536, 16
        %v1786 = vpop.permute.xlu0 %1785
        %1787 = vrot.lane.b32.xlu0 %v1539, 16
        %v1788 = vpop.permute.xlu0 %1787
        %1789 = vrot.lane.b32.xlu0 %v1544, 16
        %v1790 = vpop.permute.xlu0 %1789
        %1791 = vrot.lane.b32.xlu0 %v1547, 16
        %v1792 = vpop.permute.xlu0 %1791
        %1801 = vrot.lane.b32.xlu0 %v1597, 20
        %v1802 = vpop.permute.xlu0 %1801
        %1803 = vrot.lane.b32.xlu0 %v1600, 20
        %v1804 = vpop.permute.xlu0 %1803
        %1805 = vrot.lane.b32.xlu0 %v1605, 20
        %v1806 = vpop.permute.xlu0 %1805
        %1807 = vrot.lane.b32.xlu0 %v1608, 20
        %v1808 = vpop.permute.xlu0 %1807
        %1817 = vrot.lane.b32.xlu0 %v1658, 24
        %v1818 = vpop.permute.xlu0 %1817
        %1819 = vrot.lane.b32.xlu0 %v1661, 24
        %v1820 = vpop.permute.xlu0 %1819
        %1821 = vrot.lane.b32.xlu0 %v1666, 24
        %v1822 = vpop.permute.xlu0 %1821
        %1823 = vrot.lane.b32.xlu0 %v1669, 24
        %v1824 = vpop.permute.xlu0 %1823
        %1833 = vrot.lane.b32.xlu0 %v1719, 28
        %v1834 = vpop.permute.xlu0 %1833
        %1835 = vrot.lane.b32.xlu0 %v1722, 28
        %v1836 = vpop.permute.xlu0 %1835
        %1837 = vrot.lane.b32.xlu0 %v1727, 28
        %v1838 = vpop.permute.xlu0 %1837
        %1839 = vrot.lane.b32.xlu0 %v1730, 28
        %v1840 = vpop.permute.xlu0 %1839
        %v1845 = vsel %vm360, %v1292, %v1738
        %v1846 = vsel %vm360, %v1295, %v1740
        %v1847 = vsel %vm360, %v1300, %v1742
        %v1848 = vsel %vm360, %v1303, %v1744
        %vm1849 = vcmask 64512
        %v1850 = vsel %vm1849, %v1845, %v1754
        %v1851 = vsel %vm1849, %v1846, %v1756
        %v1852 = vsel %vm1849, %v1847, %v1758
        %v1853 = vsel %vm1849, %v1848, %v1760
        %vm1854 = vcmask 97280
        %v1855 = vsel %vm1854, %v1850, %v1770
        %v1856 = vsel %vm1854, %v1851, %v1772
        %v1857 = vsel %vm1854, %v1852, %v1774
        %v1858 = vsel %vm1854, %v1853, %v1776
        %vm1859 = vcmask 130048
        %v1860 = vsel %vm1859, %v1855, %v1786
        %v1861 = vsel %vm1859, %v1856, %v1788
        %v1862 = vsel %vm1859, %v1857, %v1790
        %v1863 = vsel %vm1859, %v1858, %v1792
        %vm1864 = vcmask 162816
        %v1865 = vsel %vm1864, %v1860, %v1802
        %v1866 = vsel %vm1864, %v1861, %v1804
        %v1867 = vsel %vm1864, %v1862, %v1806
        %v1868 = vsel %vm1864, %v1863, %v1808
        %vm1869 = vcmask 195584
        %v1870 = vsel %vm1869, %v1865, %v1818
        %v1871 = vsel %vm1869, %v1866, %v1820
        %v1872 = vsel %vm1869, %v1867, %v1822
        %v1873 = vsel %vm1869, %v1868, %v1824
        %vm1874 = vcmask 228352
        %v1875 = vsel %vm1874, %v1870, %v1834
        %v1876 = vsel %vm1874, %v1871, %v1836
        %v1877 = vsel %vm1874, %v1872, %v1838
        %v1878 = vsel %vm1874, %v1873, %v1840
        %v1879 = vpack.c.bf16 %v1876, %v1875
        %v1880 = vpack.c.bf16 %v1878, %v1877
        %v1881 = vld [vmem:[#allocation7] sm:$0xf]
        %v1882 = vld [vmem:[#allocation7 + $0x4] sm:$0xf]
        %v1883 = vld [vmem:[#allocation7 + $0x8] sm:$0xf]
        %v1884 = vld [vmem:[#allocation7 + $0xc] sm:$0xf]
        %v1885 = vld [vmem:[%s3] sm:$0x1]
        %v1887 = vlaneseq
        %v1888 = vshrl.u32 %v1887, 7
        %v1889 = vsub.s32 0, %v1888
        %v1890 = vrot.slane %v1885, %v1889
        %v1896 = vunpack.c.l.b16 %v1881
        %v1897 = vunpack.c.l.b16 %v1882
        %v1898 = vunpack.c.l.b16 %v1883
        %v1899 = vunpack.c.l.b16 %v1884
        %v1900 = vpack.c.b16 %v1897, %v1896
        %v1901 = vpack.c.b16 %v1899, %v1898
        %v1905 = vsel %vm268, %v1879, 0
        %v1908 = vsel %vm268, %v1880, 0
        %1910 = vmatprep.subr.bf16.mxu0 0
        %1911 = vmatpush1.bf16.msra.mxu0 0
        %1912 = vmatprep.subr.bf16.mxu0 0
        %1913 = vmatpush1.bf16.msra.mxu0 0
        %1914 = vmatprep.subr.bf16.mxu0 0
        %1915 = vmatpush1.bf16.msra.mxu0 0
        %1916 = vmatprep.subr.bf16.mxu0 0
        %1917 = vmatpush1.bf16.msra.mxu0 0
        %1918 = vmatprep.subr.bf16.mxu0 0
        %1919 = vmatpush1.bf16.msra.mxu0 0
        %1920 = vmatprep.subr.bf16.mxu0 0
        %1921 = vmatpush1.bf16.msra.mxu0 0
        %1922 = vmatprep.subr.bf16.mxu0 0
        %1923 = vmatpush1.bf16.msra.mxu0 %v1901
        %1924 = vmatprep.subr.bf16.mxu0 0
        %1925 = vmatpush1.bf16.msra.mxu0 %v1900
        %1926 = vmatprep.subr.bf16.mxu0 0
        %1927 = vmatpush2.bf16.msra.mxu0 0
        %1928 = vmatprep.subr.bf16.mxu0 0
        %1929 = vmatpush2.bf16.msra.mxu0 0
        %1930 = vmatprep.subr.bf16.mxu0 0
        %1931 = vmatpush2.bf16.msra.mxu0 0
        %1932 = vmatprep.subr.bf16.mxu0 0
        %1933 = vmatpush2.bf16.msra.mxu0 0
        %1934 = vmatprep.subr.bf16.mxu0 0
        %1935 = vmatpush2.bf16.msra.mxu0 0
        %1936 = vmatprep.subr.bf16.mxu0 0
        %1937 = vmatpush2.bf16.msra.mxu0 0
        %1938 = vmatprep.subr.bf16.mxu0 0
        %1939 = vmatpush2.bf16.msra.mxu0 0
        %1940 = vmatprep.subr.bf16.mxu0 0
        %1941 = vmatpush2.bf16.msra.mxu0 0
        %1942 = vmatprep.mubr.bf16.mxu0 0
        %1943 = vmatmul.mubr.bf16.gmra.mxu0 %v1905
        %v1944 = vpop.f32.mrf.mxu0
        %v1945 = vadd.f32 %v1890, %v1944
        %v1946 = vpop.f32.mrf.mxu0
        %v1947 = vpop.f32.mrf.mxu0
        %v1948 = vadd.f32 %v1890, %v1947
        %v1949 = vpop.f32.mrf.mxu0
        %1950 = vmatprep.mubr.bf16.mxu0 0
        %1951 = vmatmul.mubr.bf16.gmra.mxu0 %v1908
        %v1952 = vpop.f32.mrf.mxu0
        %v1953 = vadd.f32 %v1890, %v1952
        %v1954 = vpop.f32.mrf.mxu0
        %v1955 = vpop.f32.mrf.mxu0
        %v1956 = vadd.f32 %v1890, %v1955
        %v1957 = vpop.f32.mrf.mxu0
        %1958 = vdwg.mxu0
        %1959 = vst.msk [vmem:[%s244] sm:$0xff] %vm268, %v1945
        %1960 = vst.msk [vmem:[%s244 + $0x8] sm:$0xff] %vm268, %v1948
        %1961 = vst.msk [vmem:[%s244 + $0x10] sm:$0xff] %vm268, %v1953
        %1962 = vst.msk [vmem:[%s244 + $0x18] sm:$0xff] %vm268, %v1956
        %s1963 = sand.u32 %s119, 1
        %s1964 = scalar_lea.sflag [#allocation4], %s1963
        %s1965 = sand.u32 %s119, 1
        %s1966 = smul.addr %s1965, 32
        %s1967 = scalar_lea.vmem [#allocation8], %s1966
        // Predicated region
        $region49: #{tpu_custom_call.1} parent=35 // pred_check
          %p1968 = pneg %p129
        $region50: #{tpu_custom_call.1} parent=35 // pred_check_branch
          %1970 = sbr.rel (%p1968) target = $region52
        $region51: #{tpu_custom_call.1} parent=35 // pred_region
          %s1972 = ssub.s32 512, 512
          %1973 = vsyncadd %s1964, %s1972
          %s1974 = smul.addr %s22, 4
          %s1975 = smul.addr %s1974, 128
          %s1976 = scalar_lea.hbm %s4, %s1975
          %s1977 = sshll.u32 %s1967, 4
          %s1978 = int_to_ptr.vmem [resolvable:$true] %s1977
          %1983 = dma.vmem_to_hbm [thread:$0]  %s1978, 512, %s1976, %s1964, 128, 128, 8
        $region52: #{tpu_custom_call.1} parent=35 // pred_fallthru
          _
      $region36: #{tpu_custom_call.1} parent=5 // pred_fallthru
        _
      %p1984 = scmp.le.s32.totalorder 2, %s17
      // Predicated region
      $region53: #{tpu_custom_call.1} parent=5 // pred_check
        %p1985 = pneg %p1984
      $region54: #{tpu_custom_call.1} parent=5 // pred_check_branch
        %1987 = sbr.rel (%p1985) target = $region56
      $region55: #{tpu_custom_call.1} parent=5 // pred_region
        %s1988 = ssub.s32 %s17, 2
        // Predicated region
        $region57: #{tpu_custom_call.1} parent=55 // pred_check
          %p1989 = pneg %p135
        $region58: #{tpu_custom_call.1} parent=55 // pred_check_branch
          %1991 = sbr.rel (%p1989) target = $region60
        $region59: #{tpu_custom_call.1} parent=55 // pred_region
          %s1992 = sand.u32 %s120, 1
          %s1993 = scalar_lea.sflag [#allocation4], %s1992
          %s1994 = sand.u32 %s120, 1
          %s1995 = smul.addr %s1994, 32
          %s1996 = scalar_lea.vmem [#allocation8], %s1995
          %1997 = dma.done %s1993, 512
        $region60: #{tpu_custom_call.1} parent=55 // pred_fallthru
          _
      $region56: #{tpu_custom_call.1} parent=5 // pred_fallthru
        _
    $region6: #{tpu_custom_call.1} parent=1 // loop_footer
      %s21 = sadd.s32 1, %s17
    $region7: #{tpu_custom_call.1} parent=1 // loop_footer_branch
      %16 = sbr.rel target = $region3
    $region8: #{tpu_custom_call.1} parent=1 // loop_exit
      _
    %1998 = vsyncpa [#allocation3], 1
    %s1999 = scalar_lea.sflag [#allocation3], 1
    %2000 = vsyncpa %s1999, 1
    %2001 = vsyncpa [#allocation6], 1
    %2002 = vsyncpa [#allocation4], 1
    %s2003 = scalar_lea.sflag [#allocation4], 1
    %2004 = vsyncpa %s2003, 1

</llo_original>
